<compile_context>
chip_gen: v7x
topology: tpu7x:2x2x1
jax: 0.10.0
libtpu: 0.0.40
codegen_flags: <defaults>
</compile_context>

<pallas_src>
import math
from functools import partial

import numpy as np
import jax
import jax.numpy as jnp
from jax.experimental import pallas as pl
from jax.experimental.pallas import tpu as pltpu

HIDDEN = 32        # hidden width of the prob decoder
SCALES = 2         # profile.scales for the 'normal' profile (synthetic choice)
_INV_LN2 = 1.0 / math.log(2.0)
_BLOCK_BYTES = 4 * 1024 * 1024   # VMEM byte budget for one grid block (per buffer set)


def _cparams():
    return pltpu.CompilerParams(
        dimension_semantics=("parallel",),
        vmem_limit_bytes=32 * 1024 * 1024,
    )


def _pick_block(total, target, quantum, min_steps=2):
    """Largest block <= target that tiles `total` exactly, preferring >= min_steps
    grid steps (so v7x's two TensorCores both get work).  Falls back to the full
    extent when `total` is not a multiple of `quantum`."""
    total = int(total)
    if total % quantum != 0:
        return total
    fallback = None
    b = (min(int(target), total) // quantum) * quantum
    while b >= quantum:
        if total % b == 0:
            if total // b >= min_steps:
                return b
            if fallback is None:
                fallback = b
        b -= quantum
    return fallback if fallback is not None else total


def _make_col_perm(width, levels):
    """Recursive even/odd column permutation: after `y = x[..., perm]`, every one
    of `levels` successive 2x downsamplings along the width splits its taps with
    contiguous half slices (no strided lane access in any kernel)."""
    def rec(w, lv):
        if lv == 0:
            return np.arange(w, dtype=np.int32)
        sub = rec(w // 2, lv - 1)
        return np.concatenate([2 * sub, 2 * sub + 1])
    return rec(int(width), int(levels))


def _logistic_bin_neg_log_nats(v, inv_s, k, neg_log_1mk):
    """-log P[bin] for a discretized logistic, v = |x_q - mu| >= 0, k = exp(-1/s).

    Single exp + single log per element; stable over the whole range (exp args
    are always <= 0, the center-bin branch is clamped so log never sees 0).
    """
    b = (v - 0.5) * inv_s
    ab = jnp.abs(b)
    abc = jnp.where(b < 0.0, jnp.minimum(ab, 80.0), ab)
    t = jnp.exp(-abc)                                   # in (0, 1]
    inner = jnp.where(b < 0.0, t + k, 1.0 + t * k)
    return abc + neg_log_1mk + jnp.log((1.0 + t) * inner)


# ---------------------------------------------------------------------------
# FixedPooling(scale=2) (+ fused EntropyBottleneck at the last scale).
# Input rows hold [fine row 2h | fine row 2h+1]; with the hierarchical column
# order each 2x2 tap group is a contiguous quarter of the 4*Wo lanes.
# ---------------------------------------------------------------------------
def _pool_kernel(x_ref, x0s_ref, rnd_ref, *, Wo):
    x = x_ref[...]                                      # (C, T, 4*Wo) f32
    t00 = x[:, :, 0 * Wo:1 * Wo]                        # dh=0, dw=0
    t01 = x[:, :, 1 * Wo:2 * Wo]                        # dh=0, dw=1
    t10 = x[:, :, 2 * Wo:3 * Wo]                        # dh=1, dw=0
    t11 = x[:, :, 3 * Wo:4 * Wo]                        # dh=1, dw=1
    x0s_ref[...] = jnp.concatenate([t00, t01, t10, t11], axis=0)
    rnd_ref[...] = jnp.round(0.25 * ((t00 + t01) + (t10 + t11)))


def _pool_eb_kernel(x_ref, mu_ref, ls_ref, x0s_ref, xq_ref, bits_ref, *, Wo):
    x = x_ref[...]                                      # (C, T, 4*Wo) f32
    t00 = x[:, :, 0 * Wo:1 * Wo]
    t01 = x[:, :, 1 * Wo:2 * Wo]
    t10 = x[:, :, 2 * Wo:3 * Wo]
    t11 = x[:, :, 3 * Wo:4 * Wo]
    x0s_ref[...] = jnp.concatenate([t00, t01, t10, t11], axis=0)
    avg = 0.25 * ((t00 + t01) + (t10 + t11))
    xq = jnp.round(avg)
    xq_ref[...] = xq
    mu = mu_ref[...][:, :, None]                        # (C, 1, 1)
    inv_s = jnp.exp(-ls_ref[...])[:, :, None]
    k = jnp.exp(-inv_s)
    nl1mk = -jnp.log(1.0 - k)
    nats = _logistic_bin_neg_log_nats(jnp.abs(xq - mu), inv_s, k, nl1mk)
    bits_ref[0, 0] = jnp.sum(nats) * _INV_LN2           # per-block scalar in SMEM


def fused_pool(x, eb_params=None):
    """2x2 average pooling of a canonical (C, N, H, W) activation (width in the
    hierarchically permuted column order).  Returns (x0s, rnd, bits):
      x0s : (4C, N*Ho, Wo) sub-pixel-major copy of the *input* over the coarse grid
      rnd : (C,  N*Ho, Wo) rounded 2x2 average (== EB-quantized x when eb_params given)
      bits: scalar EB bit cost when eb_params is given, else None.
    # TODO(synk): FixedPooling's rounding-residual output (round_bits) is never
    # consumed by PMSModel.forward, so it is not materialized here.
    """
    C, N, Hf, Wf = x.shape
    Ho, Wo = Hf // 2, Wf // 2
    NR = N * Ho
    x3 = x.reshape(C, NR, 4 * Wo)                       # free reshape, x read once

    bytes_per_row = (4 * Wo + 4 * Wo + Wo) * C * 4      # input + x0s + rnd, f32
    target = max(8, (_BLOCK_BYTES // bytes_per_row) // 8 * 8)
    T = _pick_block(NR, target, 8)
    g = NR // T

    out_shape = [jax.ShapeDtypeStruct((4 * C, NR, Wo), jnp.float32),
                 jax.ShapeDtypeStruct((C, NR, Wo), jnp.float32)]
    out_specs = [pl.BlockSpec((4 * C, T, Wo), lambda i: (0, i, 0)),
                 pl.BlockSpec((C, T, Wo), lambda i: (0, i, 0))]
    in_specs = [pl.BlockSpec((C, T, 4 * Wo), lambda i: (0, i, 0))]
    operands = [x3]

    if eb_params is None:
        kern = partial(_pool_kernel, Wo=Wo)
    else:
        eb_mu, eb_log_s = eb_params
        kern = partial(_pool_eb_kernel, Wo=Wo)
        in_specs += [pl.BlockSpec((C, 1), lambda i: (0, 0)),
                     pl.BlockSpec((C, 1), lambda i: (0, 0))]
        operands += [eb_mu, eb_log_s]
        out_shape.append(jax.ShapeDtypeStruct((g, 1), jnp.float32))
        out_specs.append(pl.BlockSpec((1, 1), lambda i: (i, 0),
                                      memory_space=pltpu.MemorySpace.SMEM))

    outs = pl.pallas_call(
        kern,
        out_shape=tuple(out_shape),
        grid=(g,),
        in_specs=in_specs,
        out_specs=tuple(out_specs),
        compiler_params=_cparams(),
    )(*operands)

    x0s, rnd = outs[0], outs[1]
    bits = jnp.sum(outs[2]) if eb_params is not None else None
    return x0s, rnd, bits


# ---------------------------------------------------------------------------
# PMSMaskedDecoder (per scale): coarse-resolution 1x1-conv MLP predicting a
# discretized-logistic distribution shared by each 2x2 block of the fine image.
# ---------------------------------------------------------------------------
def _decoder_kernel(x1_ref, z2_ref, x0_ref, w1x_ref, w1z_ref, b1_ref,
                    w2_ref, b2_ref, *out_refs, C, emit_h):
    if emit_h:
        h_ref, ent_ref = out_refs
    else:
        (ent_ref,) = out_refs

    x1 = x1_ref[...]                                            # (C, TM) f32
    h = jnp.dot(w1x_ref[...], x1.astype(jnp.bfloat16),
                preferred_element_type=jnp.float32)
    h = h + jnp.dot(w1z_ref[...], z2_ref[...],
                    preferred_element_type=jnp.float32)
    h = jnp.maximum(h + b1_ref[...], 0.0)                       # (HID, TM) f32
    hb = h.astype(jnp.bfloat16)
    if emit_h:
        h_ref[...] = hb                                         # bf16 context out

    p2 = jnp.dot(w2_ref[...], hb,
                 preferred_element_type=jnp.float32) + b2_ref[...]   # (2C, TM)
    mu = p2[:C, :] + x1                                         # residual, f32 base
    log_s = jnp.clip(p2[C:, :], -8.0, 8.0)
    inv_s = jnp.exp(-log_s)
    k = jnp.exp(-inv_s)
    nl1mk = -jnp.log(1.0 - k)

    # Broadcast the per-coarse-pixel params to all 4 fine sub-pixels so the
    # EUP-bound logistic math runs on full (4C, TM) sublane tiles; single
    # cross-lane reduction at the end.
    mu4 = jnp.concatenate([mu, mu, mu, mu], axis=0)
    is4 = jnp.concatenate([inv_s, inv_s, inv_s, inv_s], axis=0)
    k4 = jnp.concatenate([k, k, k, k], axis=0)
    nl4 = jnp.concatenate([nl1mk, nl1mk, nl1mk, nl1mk], axis=0)
    nats = _logistic_bin_neg_log_nats(jnp.abs(x0_ref[...] - mu4), is4, k4, nl4)
    ent_ref[0, 0] = jnp.sum(nats) * _INV_LN2                    # SMEM scalar


def prob_decoder(z2, x1, x0s, params, emit_h):
    """One scale of the (reconstructed) PMSMaskedDecoder.

    z2: (HID, M) bf16 context, x1: (C, M) f32 decoded coarse image,
    x0s: (4C, M) f32 fine sub-pixels.  Returns (h_bf16 | None, entropy_bits).
    """
    C, M = x1.shape
    HID = z2.shape[0]
    bytes_per_col = 4 * C + 2 * HID + 16 * C + (2 * HID if emit_h else 0)
    target = max(128, (_BLOCK_BYTES // bytes_per_col) // 128 * 128)
    tm = _pick_block(M, target, 128)
    g = M // tm

    out_shape = []
    out_specs = []
    if emit_h:
        out_shape.append(jax.ShapeDtypeStruct((HID, M), jnp.bfloat16))
        out_specs.append(pl.BlockSpec((HID, tm), lambda i: (0, i)))
    out_shape.append(jax.ShapeDtypeStruct((g, 1), jnp.float32))
    out_specs.append(pl.BlockSpec((1, 1), lambda i: (i, 0),
                                  memory_space=pltpu.MemorySpace.SMEM))

    outs = pl.pallas_call(
        partial(_decoder_kernel, C=C, emit_h=emit_h),
        out_shape=tuple(out_shape),
        grid=(g,),
        in_specs=[pl.BlockSpec((C, tm), lambda i: (0, i)),
                  pl.BlockSpec((HID, tm), lambda i: (0, i)),
                  pl.BlockSpec((4 * C, tm), lambda i: (0, i)),
                  pl.BlockSpec((HID, C), lambda i: (0, 0)),
                  pl.BlockSpec((HID, HID), lambda i: (0, 0)),
                  pl.BlockSpec((HID, 1), lambda i: (0, 0)),
                  pl.BlockSpec((2 * C, HID), lambda i: (0, 0)),
                  pl.BlockSpec((2 * C, 1), lambda i: (0, 0))],
        out_specs=tuple(out_specs),
        compiler_params=_cparams(),
    )(x1, z2, x0s, params['w1x_t'], params['w1z_t'], params['b1'],
      params['w2_t'], params['b2'])

    if emit_h:
        h, ent = outs
        return h, jnp.sum(ent)
    return None, jnp.sum(outs[0])


# ---------------------------------------------------------------------------
# PMSModel
# ---------------------------------------------------------------------------
class PMSModelPallas:
    def __init__(self, input_channels, scales=SCALES, hidden=HIDDEN, seed=0):
        self.C = int(input_channels)
        self.scales = int(scales)
        self.hidden = int(hidden)
        C, Ch = self.C, self.hidden
        k = jax.random.split(jax.random.PRNGKey(seed), 5)
        s = 0.1
        w1x = s * jax.random.normal(k[2], (C, Ch), jnp.float32)
        w1z = s * jax.random.normal(k[3], (Ch, Ch), jnp.float32)
        w2 = s * jax.random.normal(k[4], (Ch, 2 * C), jnp.float32)
        self.params = {
            # EntropyBottleneck per-channel factorized-logistic params
            'eb_mu': 0.05 * jax.random.normal(k[0], (C, 1), jnp.float32),
            'eb_log_s': 0.05 * jax.random.normal(k[1], (C, 1), jnp.float32),
            # decoder 1x1-conv MLP: split/stacked, pre-transposed, bf16 for MXU
            'w1x_t': w1x.T.astype(jnp.bfloat16),                          # (Ch, C)
            'w1z_t': w1z.T.astype(jnp.bfloat16),                          # (Ch, Ch)
            'b1': jnp.zeros((Ch, 1), jnp.float32),
            'w2_t': jnp.concatenate([w2[:, :C].T, w2[:, C:].T],
                                    axis=0).astype(jnp.bfloat16),         # (2C, Ch)
            'b2': jnp.zeros((2 * C, 1), jnp.float32),
        }
        self._fwd = jax.jit(self._forward_impl)

    def _forward_impl(self, params, x_hat):
        C, HID, scales = self.C, self.hidden, self.scales
        N, _, H, W = x_hat.shape
        if H % (1 << scales) or W % (1 << scales):
            raise ValueError('spatial dims must be divisible by 2**scales')

        # Canonical (C, N, H, W) layout with the width axis in hierarchical
        # even/odd order (single gather fused with the transpose): all pooling
        # scales then use only contiguous lane slices, and the nearest-neighbour
        # context upsample becomes a plain tile + row repeat.  All rate terms are
        # order-invariant sums, and y_hat is returned unpermuted.
        perm = jnp.asarray(_make_col_perm(W, scales))
        xc = jnp.take(jnp.transpose(x_hat, (1, 0, 2, 3)), perm, axis=3)

        # pooling pyramid (EB fused into the last scale)
        x = xc
        x0s_list, x1_list, hw_list = [], [], []
        bits = None
        for si in range(scales):
            _, _, Hf, Wf = x.shape
            Ho, Wo = Hf // 2, Wf // 2
            last = (si == scales - 1)
            eb = (params['eb_mu'], params['eb_log_s']) if last else None
            x0s, rnd, b = fused_pool(x, eb)
            x0s_list.append(x0s.reshape(4 * C, N * Ho * Wo))
            x1_list.append(rnd.reshape(C, N * Ho * Wo))
            hw_list.append((Ho, Wo))
            if last:
                bits = b
            x = rnd.reshape(C, N, Ho, Wo)

        # TODO(synk): EntropyBottleneck.loss() has no available source; a small
        # L1 surrogate on the per-channel means stands in for the aux term.
        rate = bits + 0.001 * jnp.sum(jnp.abs(params['eb_mu']))

        # coarse-to-fine conditional decoding
        # TODO(synk): PMSMaskedDecoder's kv_buffer / masked-attention caching has
        # no available source; cross-scale context is carried through z2 (= h).
        z2 = jnp.zeros((HID, x1_list[-1].shape[1]), jnp.bfloat16)
        for ii in reversed(range(scales)):
            emit_h = ii > 0
            h, ent = prob_decoder(z2, x1_list[ii], x0s_list[ii], params, emit_h)
            rate = rate + ent
            if emit_h:
                H2, W2 = hw_list[ii]
                # TODO(synk): the bf16 nearest-neighbour upsample of the context is
                # the one remaining wrapper-side HBM materialization (single XLA
                # broadcast); under the permuted column order it is tile + repeat.
                hz = h.reshape(HID, N, H2, W2)
                zw = jnp.concatenate([hz, hz], axis=3)        # width: j -> j mod W2
                z2 = jnp.broadcast_to(
                    zw[:, :, :, None, :],
                    (HID, N, H2, 2, 2 * W2)).reshape(HID, N * 2 * H2 * 2 * W2)

        # at the finest scale y_hat == x0 == x_hat (teacher-forced reconstruction)
        return x_hat, jnp.reshape(rate, (1,))

    def get_downsampled(self, x_hat):
        """Mirror of PMSModel.get_downsampled (NCHW in/out).  Plain XLA ops --
        this path is not consumed by forward()."""
        out = []
        x = x_hat
        for _ in range(self.scales):
            n, c, h, w = x.shape
            avg = x.reshape(n, c, h // 2, 2, w // 2, 2).mean(axis=(3, 5))
            x = jnp.round(avg)
            out.append([avg, x, None])   # TODO(synk): round_bits not modeled
        return out

    def forward(self, x_hat):
        # TODO(synk): the reference's integer-input warning (torch.norm check)
        # forces a device->host sync before any kernel runs and is omitted from
        # the jitted forward on purpose.
        return self._fwd(self.params, x_hat)


# ---------------------------------------------------------------------------
# Pure-JAX reference of the same (reconstructed) forward semantics, computed in
# the natural (unpermuted) pixel order -- used only for the runtime self-check.
# ---------------------------------------------------------------------------
def _reference_rate(params, x_hat, scales, hidden):
    N, C = x_hat.shape[0], x_hat.shape[1]
    HID = hidden
    xc = jnp.transpose(x_hat, (1, 0, 2, 3))
    imgs = [xc]
    avg_last = None
    for _ in range(scales):
        cur = imgs[-1]
        _, _, Hf, Wf = cur.shape
        avg = cur.reshape(C, N, Hf // 2, 2, Wf // 2, 2).mean(axis=(3, 5))
        imgs.append(jnp.round(avg))
        avg_last = avg

    mu = params['eb_mu'].reshape(C, 1, 1, 1)
    ls = params['eb_log_s'].reshape(C, 1, 1, 1)
    xq = jnp.round(avg_last)
    inv_s = jnp.exp(-ls)
    k = jnp.exp(-inv_s)
    nl = -jnp.log(1.0 - k)
    rate = jnp.sum(_logistic_bin_neg_log_nats(jnp.abs(xq - mu), inv_s, k, nl)) * _INV_LN2
    rate = rate + 0.001 * jnp.sum(jnp.abs(params['eb_mu']))

    z2 = None
    for ii in reversed(range(scales)):
        x1 = imgs[ii + 1]
        x0 = imgs[ii]
        _, _, H2, W2 = x1.shape
        M = N * H2 * W2
        x1f = x1.reshape(C, M)
        z2b = jnp.zeros((HID, M), jnp.bfloat16) if z2 is None else z2.reshape(HID, M)
        h = jnp.dot(params['w1x_t'], x1f.astype(jnp.bfloat16),
                    preferred_element_type=jnp.float32)
        h = h + jnp.dot(params['w1z_t'], z2b, preferred_element_type=jnp.float32)
        h = jnp.maximum(h + params['b1'], 0.0)
        hb = h.astype(jnp.bfloat16)
        p2 = jnp.dot(params['w2_t'], hb, preferred_element_type=jnp.float32) + params['b2']
        mu2 = p2[:C] + x1f
        log_s = jnp.clip(p2[C:], -8.0, 8.0)
        inv_s2 = jnp.exp(-log_s)
        k2 = jnp.exp(-inv_s2)
        nl2 = -jnp.log(1.0 - k2)
        x06 = x0.reshape(C, N, H2, 2, W2, 2)
        ent = 0.0
        for dh in range(2):
            for dw in range(2):
                x0p = x06[:, :, :, dh, :, dw].reshape(C, M)
                ent = ent + jnp.sum(_logistic_bin_neg_log_nats(
                    jnp.abs(x0p - mu2), inv_s2, k2, nl2))
        rate = rate + ent * _INV_LN2
        if ii > 0:
            hz = hb.reshape(HID, N, H2, W2)
            z2 = jnp.repeat(jnp.repeat(hz, 2, axis=2), 2, axis=3)
    return rate


if __name__ == "__main__":
    key = jax.random.PRNGKey(0)
    N, C, H, W = 2, 4, 16, 16
    x_hat = 3.0 * jax.random.normal(key, (N, C, H, W), jnp.float32)

    model = PMSModelPallas(input_channels=C)
    y_hat, rate_loss = model.forward(x_hat)
    jax.block_until_ready((y_hat, rate_loss))

    assert y_hat.shape == (N, C, H, W)
    assert rate_loss.shape == (1,)
    assert bool(jnp.isfinite(y_hat).all())
    assert bool(jnp.isfinite(rate_loss).all())

    # pure-JAX reference check (order-independent rate must match the kernels)
    rate_ref = _reference_rate(model.params, x_hat, model.scales, model.hidden)
    assert bool(jnp.allclose(rate_loss[0], rate_ref, rtol=1e-2, atol=1.0)), (
        float(rate_loss[0]), float(rate_ref))

    print("KERNEL_OK")
</pallas_src>

<mosaic_0001>
module attributes {stable_mosaic.version = 11 : i64} {
  func.func @_pool_kernel(%arg0: i32, %arg1: memref<4x8x32xf32, #tpu.memory_space<vmem>>, %arg2: memref<16x8x8xf32, #tpu.memory_space<vmem>>, %arg3: memref<4x8x8xf32, #tpu.memory_space<vmem>>) attributes {dimension_semantics = [#tpu.dimension_semantics<parallel>], iteration_bounds = array<i64: 2>, scalar_prefetch = 0 : i64, scratch_operands = 0 : i64, tpu.core_type = #tpu.core_type<tc>, window_params = [{transform_indices = @transform_0, window_bounds = array<i64: 4, 8, 32>}, {transform_indices = @transform_1, window_bounds = array<i64: 16, 8, 8>}, {transform_indices = @transform_2, window_bounds = array<i64: 4, 8, 8>}]} {
    %c0 = arith.constant 0 : index
    %c0_0 = arith.constant 0 : index
    %c0_1 = arith.constant 0 : index
    %0 = vector.load %arg1[%c0, %c0_0, %c0_1] : memref<4x8x32xf32, #tpu.memory_space<vmem>>, vector<4x8x32xf32>
    %1 = vector.extract_strided_slice %0 {offsets = [0, 0, 0], sizes = [4, 8, 8], strides = [1, 1, 1]} : vector<4x8x32xf32> to vector<4x8x8xf32>
    %2 = vector.extract_strided_slice %0 {offsets = [0, 0, 8], sizes = [4, 8, 8], strides = [1, 1, 1]} : vector<4x8x32xf32> to vector<4x8x8xf32>
    %3 = vector.extract_strided_slice %0 {offsets = [0, 0, 16], sizes = [4, 8, 8], strides = [1, 1, 1]} : vector<4x8x32xf32> to vector<4x8x8xf32>
    %4 = vector.extract_strided_slice %0 {offsets = [0, 0, 24], sizes = [4, 8, 8], strides = [1, 1, 1]} : vector<4x8x32xf32> to vector<4x8x8xf32>
    %5 = tpu.concatenate %1, %2, %3, %4 in 0 : vector<4x8x8xf32>, vector<4x8x8xf32>, vector<4x8x8xf32>, vector<4x8x8xf32> -> vector<16x8x8xf32>
    %c0_2 = arith.constant 0 : index
    %c0_3 = arith.constant 0 : index
    %c0_4 = arith.constant 0 : index
    %6 = vector.load %arg2[%c0_2, %c0_3, %c0_4] : memref<16x8x8xf32, #tpu.memory_space<vmem>>, vector<16x8x8xf32>
    tpu.vector_store %arg2[%c0_2, %c0_3, %c0_4], %5 {strides = array<i32>} : memref<16x8x8xf32, #tpu.memory_space<vmem>>, vector<16x8x8xf32>,
    %7 = arith.addf %1, %2 : vector<4x8x8xf32>
    %8 = arith.addf %3, %4 : vector<4x8x8xf32>
    %9 = arith.addf %7, %8 : vector<4x8x8xf32>
    %cst = arith.constant 2.500000e-01 : f32
    %10 = vector.broadcast %cst : f32 to vector<4x8x8xf32>
    %11 = arith.mulf %10, %9 : vector<4x8x8xf32>
    %12 = math.roundeven %11 : vector<4x8x8xf32>
    %c0_5 = arith.constant 0 : index
    %c0_6 = arith.constant 0 : index
    %c0_7 = arith.constant 0 : index
    %13 = vector.load %arg3[%c0_5, %c0_6, %c0_7] : memref<4x8x8xf32, #tpu.memory_space<vmem>>, vector<4x8x8xf32>
    tpu.vector_store %arg3[%c0_5, %c0_6, %c0_7], %12 {strides = array<i32>} : memref<4x8x8xf32, #tpu.memory_space<vmem>>, vector<4x8x8xf32>,
    return
  }
  func.func @transform_0(%arg0: i32) -> (i32, i32, i32) {
    %c0_i32 = arith.constant 0 : i32
    %c0_i32_0 = arith.constant 0 : i32
    %c0_i32_1 = arith.constant 0 : i32
    return %c0_i32, %arg0, %c0_i32_0 : i32, i32, i32
  }
  func.func @transform_1(%arg0: i32) -> (i32, i32, i32) {
    %c0_i32 = arith.constant 0 : i32
    %c0_i32_0 = arith.constant 0 : i32
    %c0_i32_1 = arith.constant 0 : i32
    return %c0_i32, %arg0, %c0_i32_0 : i32, i32, i32
  }
  func.func @transform_2(%arg0: i32) -> (i32, i32, i32) {
    %c0_i32 = arith.constant 0 : i32
    %c0_i32_0 = arith.constant 0 : i32
    %c0_i32_1 = arith.constant 0 : i32
    return %c0_i32, %arg0, %c0_i32_0 : i32, i32, i32
  }
}

module attributes {stable_mosaic.version = 11 : i64} {
  func.func @_pool_eb_kernel(%arg0: i32, %arg1: memref<4x8x16xf32, #tpu.memory_space<vmem>>, %arg2: memref<4x1xf32, #tpu.memory_space<vmem>>, %arg3: memref<4x1xf32, #tpu.memory_space<vmem>>, %arg4: memref<16x8x4xf32, #tpu.memory_space<vmem>>, %arg5: memref<4x8x4xf32, #tpu.memory_space<vmem>>, %arg6: memref<1x1xf32, #tpu.memory_space<smem>>) attributes {dimension_semantics = [#tpu.dimension_semantics<parallel>], iteration_bounds = array<i64: 1>, scalar_prefetch = 0 : i64, scratch_operands = 0 : i64, tpu.core_type = #tpu.core_type<tc>, window_params = [{transform_indices = @transform_0, window_bounds = array<i64: 4, 8, 16>}, {pipeline_mode = #tpu.pipeline_mode<synchronous>, transform_indices = @transform_1, window_bounds = array<i64: 4, 1>}, {pipeline_mode = #tpu.pipeline_mode<synchronous>, transform_indices = @transform_2, window_bounds = array<i64: 4, 1>}, {transform_indices = @transform_3, window_bounds = array<i64: 16, 8, 4>}, {transform_indices = @transform_4, window_bounds = array<i64: 4, 8, 4>}, {transform_indices = @transform_5, window_bounds = array<i64: 1, 1>}]} {
    %c0 = arith.constant 0 : index
    %c0_0 = arith.constant 0 : index
    %c0_1 = arith.constant 0 : index
    %0 = vector.load %arg1[%c0, %c0_0, %c0_1] : memref<4x8x16xf32, #tpu.memory_space<vmem>>, vector<4x8x16xf32>
    %1 = vector.extract_strided_slice %0 {offsets = [0, 0, 0], sizes = [4, 8, 4], strides = [1, 1, 1]} : vector<4x8x16xf32> to vector<4x8x4xf32>
    %2 = vector.extract_strided_slice %0 {offsets = [0, 0, 4], sizes = [4, 8, 4], strides = [1, 1, 1]} : vector<4x8x16xf32> to vector<4x8x4xf32>
    %3 = vector.extract_strided_slice %0 {offsets = [0, 0, 8], sizes = [4, 8, 4], strides = [1, 1, 1]} : vector<4x8x16xf32> to vector<4x8x4xf32>
    %4 = vector.extract_strided_slice %0 {offsets = [0, 0, 12], sizes = [4, 8, 4], strides = [1, 1, 1]} : vector<4x8x16xf32> to vector<4x8x4xf32>
    %5 = tpu.concatenate %1, %2, %3, %4 in 0 : vector<4x8x4xf32>, vector<4x8x4xf32>, vector<4x8x4xf32>, vector<4x8x4xf32> -> vector<16x8x4xf32>
    %c0_2 = arith.constant 0 : index
    %c0_3 = arith.constant 0 : index
    %c0_4 = arith.constant 0 : index
    %6 = vector.load %arg4[%c0_2, %c0_3, %c0_4] : memref<16x8x4xf32, #tpu.memory_space<vmem>>, vector<16x8x4xf32>
    tpu.vector_store %arg4[%c0_2, %c0_3, %c0_4], %5 {strides = array<i32>} : memref<16x8x4xf32, #tpu.memory_space<vmem>>, vector<16x8x4xf32>,
    %7 = arith.addf %1, %2 : vector<4x8x4xf32>
    %8 = arith.addf %3, %4 : vector<4x8x4xf32>
    %9 = arith.addf %7, %8 : vector<4x8x4xf32>
    %cst = arith.constant 2.500000e-01 : f32
    %10 = vector.broadcast %cst : f32 to vector<4x8x4xf32>
    %11 = arith.mulf %10, %9 : vector<4x8x4xf32>
    %12 = math.roundeven %11 : vector<4x8x4xf32>
    %c0_5 = arith.constant 0 : index
    %c0_6 = arith.constant 0 : index
    %c0_7 = arith.constant 0 : index
    %13 = vector.load %arg5[%c0_5, %c0_6, %c0_7] : memref<4x8x4xf32, #tpu.memory_space<vmem>>, vector<4x8x4xf32>
    tpu.vector_store %arg5[%c0_5, %c0_6, %c0_7], %12 {strides = array<i32>} : memref<4x8x4xf32, #tpu.memory_space<vmem>>, vector<4x8x4xf32>,
    %c0_8 = arith.constant 0 : index
    %c0_9 = arith.constant 0 : index
    %14 = vector.load %arg2[%c0_8, %c0_9] : memref<4x1xf32, #tpu.memory_space<vmem>>, vector<4x1xf32>
    %15 = vector.shape_cast %14 : vector<4x1xf32> to vector<4x1x1xf32>
    %c0_10 = arith.constant 0 : index
    %c0_11 = arith.constant 0 : index
    %16 = vector.load %arg3[%c0_10, %c0_11] : memref<4x1xf32, #tpu.memory_space<vmem>>, vector<4x1xf32>
    %cst_12 = arith.constant 0.000000e+00 : f32
    %17 = vector.broadcast %cst_12 : f32 to vector<4x1xf32>
    %18 = arith.subf %17, %16 : vector<4x1xf32>
    %19 = math.exp %18 : vector<4x1xf32>
    %20 = vector.shape_cast %19 : vector<4x1xf32> to vector<4x1x1xf32>
    %cst_13 = arith.constant 0.000000e+00 : f32
    %21 = vector.broadcast %cst_13 : f32 to vector<4x1x1xf32>
    %22 = arith.subf %21, %20 : vector<4x1x1xf32>
    %23 = math.exp %22 : vector<4x1x1xf32>
    %cst_14 = arith.constant 1.000000e+00 : f32
    %24 = vector.broadcast %cst_14 : f32 to vector<4x1x1xf32>
    %25 = arith.subf %24, %23 : vector<4x1x1xf32>
    %26 = math.log %25 : vector<4x1x1xf32>
    %cst_15 = arith.constant 0.000000e+00 : f32
    %27 = vector.broadcast %cst_15 : f32 to vector<4x1x1xf32>
    %28 = arith.subf %27, %26 : vector<4x1x1xf32>
    %29 = vector.broadcast %15 : vector<4x1x1xf32> to vector<4x8x4xf32>
    %30 = arith.subf %12, %29 : vector<4x8x4xf32>
    %31 = math.absf %30 : vector<4x8x4xf32>
    %cst_16 = arith.constant 5.000000e-01 : f32
    %32 = vector.broadcast %cst_16 : f32 to vector<4x8x4xf32>
    %33 = arith.subf %31, %32 : vector<4x8x4xf32>
    %34 = vector.broadcast %20 : vector<4x1x1xf32> to vector<4x8x4xf32>
    %35 = arith.mulf %33, %34 : vector<4x8x4xf32>
    %36 = math.absf %35 : vector<4x8x4xf32>
    %cst_17 = arith.constant 0.000000e+00 : f32
    %37 = vector.broadcast %cst_17 : f32 to vector<4x8x4xf32>
    %38 = arith.cmpf olt, %35, %37 : vector<4x8x4xf32>
    %cst_18 = arith.constant 8.000000e+01 : f32
    %39 = vector.broadcast %cst_18 : f32 to vector<4x8x4xf32>
    %40 = arith.minimumf %36, %39 : vector<4x8x4xf32>
    %41 = arith.select %38, %40, %36 : vector<4x8x4xi1>, vector<4x8x4xf32>
    %cst_19 = arith.constant 0.000000e+00 : f32
    %42 = vector.broadcast %cst_19 : f32 to vector<4x8x4xf32>
    %43 = arith.subf %42, %41 : vector<4x8x4xf32>
    %44 = math.exp %43 : vector<4x8x4xf32>
    %cst_20 = arith.constant 0.000000e+00 : f32
    %45 = vector.broadcast %cst_20 : f32 to vector<4x8x4xf32>
    %46 = arith.cmpf olt, %35, %45 : vector<4x8x4xf32>
    %47 = vector.broadcast %23 : vector<4x1x1xf32> to vector<4x8x4xf32>
    %48 = arith.addf %44, %47 : vector<4x8x4xf32>
    %49 = vector.broadcast %23 : vector<4x1x1xf32> to vector<4x8x4xf32>
    %50 = arith.mulf %44, %49 : vector<4x8x4xf32>
    %cst_21 = arith.constant 1.000000e+00 : f32
    %51 = vector.broadcast %cst_21 : f32 to vector<4x8x4xf32>
    %52 = arith.addf %51, %50 : vector<4x8x4xf32>
    %53 = arith.select %46, %48, %52 : vector<4x8x4xi1>, vector<4x8x4xf32>
    %54 = vector.broadcast %28 : vector<4x1x1xf32> to vector<4x8x4xf32>
    %55 = arith.addf %41, %54 : vector<4x8x4xf32>
    %cst_22 = arith.constant 1.000000e+00 : f32
    %56 = vector.broadcast %cst_22 : f32 to vector<4x8x4xf32>
    %57 = arith.addf %56, %44 : vector<4x8x4xf32>
    %58 = arith.mulf %57, %53 : vector<4x8x4xf32>
    %59 = math.log %58 : vector<4x8x4xf32>
    %60 = arith.addf %55, %59 : vector<4x8x4xf32>
    %61 = vector.shape_cast %60 : vector<4x8x4xf32> to vector<1x4x8x4xf32>
    %cst_23 = arith.constant dense<0.000000e+00> : vector<1xf32>
    %62 = vector.multi_reduction <add>, %61, %cst_23 [1, 2, 3] : vector<1x4x8x4xf32> to vector<1xf32>
    %63 = vector.shape_cast %62 : vector<1xf32> to vector<1x1x1x1xf32>
    %64 = vector.extract %63[0, 0, 0, 0] : f32 from vector<1x1x1x1xf32>
    %cst_24 = arith.constant 1.44269502 : f32
    %65 = arith.mulf %64, %cst_24 : f32
    %c0_25 = arith.constant 0 : index
    %c0_26 = arith.constant 0 : index
    %66 = memref.load %arg6[%c0_25, %c0_26] : memref<1x1xf32, #tpu.memory_space<smem>>
    memref.store %65, %arg6[%c0_25, %c0_26] : memref<1x1xf32, #tpu.memory_space<smem>>
    return
  }
  func.func @transform_0(%arg0: i32) -> (i32, i32, i32) {
    %c0_i32 = arith.constant 0 : i32
    %c0_i32_0 = arith.constant 0 : i32
    %c0_i32_1 = arith.constant 0 : i32
    return %c0_i32, %arg0, %c0_i32_0 : i32, i32, i32
  }
  func.func @transform_1(%arg0: i32) -> (i32, i32) {
    %c0_i32 = arith.constant 0 : i32
    %c0_i32_0 = arith.constant 0 : i32
    %c0_i32_1 = arith.constant 0 : i32
    return %c0_i32, %c0_i32_0 : i32, i32
  }
  func.func @transform_2(%arg0: i32) -> (i32, i32) {
    %c0_i32 = arith.constant 0 : i32
    %c0_i32_0 = arith.constant 0 : i32
    %c0_i32_1 = arith.constant 0 : i32
    return %c0_i32, %c0_i32_0 : i32, i32
  }
  func.func @transform_3(%arg0: i32) -> (i32, i32, i32) {
    %c0_i32 = arith.constant 0 : i32
    %c0_i32_0 = arith.constant 0 : i32
    %c0_i32_1 = arith.constant 0 : i32
    return %c0_i32, %arg0, %c0_i32_0 : i32, i32, i32
  }
  func.func @transform_4(%arg0: i32) -> (i32, i32, i32) {
    %c0_i32 = arith.constant 0 : i32
    %c0_i32_0 = arith.constant 0 : i32
    %c0_i32_1 = arith.constant 0 : i32
    return %c0_i32, %arg0, %c0_i32_0 : i32, i32, i32
  }
  func.func @transform_5(%arg0: i32) -> (i32, i32) {
    %c0_i32 = arith.constant 0 : i32
    %c0_i32_0 = arith.constant 0 : i32
    return %arg0, %c0_i32 : i32, i32
  }
}

module attributes {stable_mosaic.version = 11 : i64} {
  func.func @_decoder_kernel(%arg0: i32, %arg1: memref<4x32xf32, #tpu.memory_space<vmem>>, %arg2: memref<32x32xbf16, #tpu.memory_space<vmem>>, %arg3: memref<16x32xf32, #tpu.memory_space<vmem>>, %arg4: memref<32x4xbf16, #tpu.memory_space<vmem>>, %arg5: memref<32x32xbf16, #tpu.memory_space<vmem>>, %arg6: memref<32x1xf32, #tpu.memory_space<vmem>>, %arg7: memref<8x32xbf16, #tpu.memory_space<vmem>>, %arg8: memref<8x1xf32, #tpu.memory_space<vmem>>, %arg9: memref<32x32xbf16, #tpu.memory_space<vmem>>, %arg10: memref<1x1xf32, #tpu.memory_space<smem>>) attributes {dimension_semantics = [#tpu.dimension_semantics<parallel>], iteration_bounds = array<i64: 1>, scalar_prefetch = 0 : i64, scratch_operands = 0 : i64, tpu.core_type = #tpu.core_type<tc>, window_params = [{transform_indices = @transform_0, window_bounds = array<i64: 4, 32>}, {transform_indices = @transform_1, window_bounds = array<i64: 32, 32>}, {transform_indices = @transform_2, window_bounds = array<i64: 16, 32>}, {pipeline_mode = #tpu.pipeline_mode<synchronous>, transform_indices = @transform_3, window_bounds = array<i64: 32, 4>}, {pipeline_mode = #tpu.pipeline_mode<synchronous>, transform_indices = @transform_4, window_bounds = array<i64: 32, 32>}, {pipeline_mode = #tpu.pipeline_mode<synchronous>, transform_indices = @transform_5, window_bounds = array<i64: 32, 1>}, {pipeline_mode = #tpu.pipeline_mode<synchronous>, transform_indices = @transform_6, window_bounds = array<i64: 8, 32>}, {pipeline_mode = #tpu.pipeline_mode<synchronous>, transform_indices = @transform_7, window_bounds = array<i64: 8, 1>}, {transform_indices = @transform_8, window_bounds = array<i64: 32, 32>}, {transform_indices = @transform_9, window_bounds = array<i64: 1, 1>}]} {
    %c0 = arith.constant 0 : index
    %c0_0 = arith.constant 0 : index
    %0 = vector.load %arg1[%c0, %c0_0] : memref<4x32xf32, #tpu.memory_space<vmem>>, vector<4x32xf32>
    %c0_1 = arith.constant 0 : index
    %c0_2 = arith.constant 0 : index
    %1 = vector.load %arg4[%c0_1, %c0_2] : memref<32x4xbf16, #tpu.memory_space<vmem>>, vector<32x4xbf16>
    %2 = arith.truncf %0 : vector<4x32xf32> to vector<4x32xbf16>
    %cst = arith.constant dense<0.000000e+00> : vector<32x32xf32>
    %3 = tpu.matmul %1, %2, %cst {dimension_numbers = #tpu.dot_dimension_numbers<[1], [0], [0], [1], [0, 0, 1, 1], [], []>} : vector<32x4xbf16>, vector<4x32xbf16>, vector<32x32xf32> -> vector<32x32xf32>
    %c0_3 = arith.constant 0 : index
    %c0_4 = arith.constant 0 : index
    %4 = vector.load %arg5[%c0_3, %c0_4] : memref<32x32xbf16, #tpu.memory_space<vmem>>, vector<32x32xbf16>
    %c0_5 = arith.constant 0 : index
    %c0_6 = arith.constant 0 : index
    %5 = vector.load %arg2[%c0_5, %c0_6] : memref<32x32xbf16, #tpu.memory_space<vmem>>, vector<32x32xbf16>
    %cst_7 = arith.constant dense<0.000000e+00> : vector<32x32xf32>
    %6 = tpu.matmul %4, %5, %cst_7 {dimension_numbers = #tpu.dot_dimension_numbers<[1], [0], [0], [1], [0, 0, 1, 1], [], []>} : vector<32x32xbf16>, vector<32x32xbf16>, vector<32x32xf32> -> vector<32x32xf32>
    %7 = arith.addf %3, %6 : vector<32x32xf32>
    %c0_8 = arith.constant 0 : index
    %c0_9 = arith.constant 0 : index
    %8 = vector.load %arg6[%c0_8, %c0_9] : memref<32x1xf32, #tpu.memory_space<vmem>>, vector<32x1xf32>
    %9 = vector.broadcast %8 : vector<32x1xf32> to vector<32x32xf32>
    %10 = arith.addf %7, %9 : vector<32x32xf32>
    %cst_10 = arith.constant 0.000000e+00 : f32
    %11 = vector.broadcast %cst_10 : f32 to vector<32x32xf32>
    %12 = arith.maximumf %10, %11 : vector<32x32xf32>
    %13 = arith.truncf %12 : vector<32x32xf32> to vector<32x32xbf16>
    %c0_11 = arith.constant 0 : index
    %c0_12 = arith.constant 0 : index
    %14 = vector.load %arg9[%c0_11, %c0_12] : memref<32x32xbf16, #tpu.memory_space<vmem>>, vector<32x32xbf16>
    tpu.vector_store %arg9[%c0_11, %c0_12], %13 {strides = array<i32>} : memref<32x32xbf16, #tpu.memory_space<vmem>>, vector<32x32xbf16>,
    %c0_13 = arith.constant 0 : index
    %c0_14 = arith.constant 0 : index
    %15 = vector.load %arg7[%c0_13, %c0_14] : memref<8x32xbf16, #tpu.memory_space<vmem>>, vector<8x32xbf16>
    %cst_15 = arith.constant dense<0.000000e+00> : vector<8x32xf32>
    %16 = tpu.matmul %15, %13, %cst_15 {dimension_numbers = #tpu.dot_dimension_numbers<[1], [0], [0], [1], [0, 0, 1, 1], [], []>} : vector<8x32xbf16>, vector<32x32xbf16>, vector<8x32xf32> -> vector<8x32xf32>
    %c0_16 = arith.constant 0 : index
    %c0_17 = arith.constant 0 : index
    %17 = vector.load %arg8[%c0_16, %c0_17] : memref<8x1xf32, #tpu.memory_space<vmem>>, vector<8x1xf32>
    %18 = vector.broadcast %17 : vector<8x1xf32> to vector<8x32xf32>
    %19 = arith.addf %16, %18 : vector<8x32xf32>
    %20 = vector.extract_strided_slice %19 {offsets = [0, 0], sizes = [4, 32], strides = [1, 1]} : vector<8x32xf32> to vector<4x32xf32>
    %21 = arith.addf %20, %0 : vector<4x32xf32>
    %22 = vector.extract_strided_slice %19 {offsets = [4, 0], sizes = [4, 32], strides = [1, 1]} : vector<8x32xf32> to vector<4x32xf32>
    %cst_18 = arith.constant -8.000000e+00 : f32
    %cst_19 = arith.constant 8.000000e+00 : f32
    %23 = vector.broadcast %cst_18 : f32 to vector<4x32xf32>
    %24 = arith.maximumf %23, %22 : vector<4x32xf32>
    %25 = vector.broadcast %cst_19 : f32 to vector<4x32xf32>
    %26 = arith.minimumf %25, %24 : vector<4x32xf32>
    %cst_20 = arith.constant 0.000000e+00 : f32
    %27 = vector.broadcast %cst_20 : f32 to vector<4x32xf32>
    %28 = arith.subf %27, %26 : vector<4x32xf32>
    %29 = math.exp %28 : vector<4x32xf32>
    %cst_21 = arith.constant 0.000000e+00 : f32
    %30 = vector.broadcast %cst_21 : f32 to vector<4x32xf32>
    %31 = arith.subf %30, %29 : vector<4x32xf32>
    %32 = math.exp %31 : vector<4x32xf32>
    %cst_22 = arith.constant 1.000000e+00 : f32
    %33 = vector.broadcast %cst_22 : f32 to vector<4x32xf32>
    %34 = arith.subf %33, %32 : vector<4x32xf32>
    %35 = math.log %34 : vector<4x32xf32>
    %cst_23 = arith.constant 0.000000e+00 : f32
    %36 = vector.broadcast %cst_23 : f32 to vector<4x32xf32>
    %37 = arith.subf %36, %35 : vector<4x32xf32>
    %38 = tpu.concatenate %21, %21, %21, %21 in 0 : vector<4x32xf32>, vector<4x32xf32>, vector<4x32xf32>, vector<4x32xf32> -> vector<16x32xf32>
    %39 = tpu.concatenate %29, %29, %29, %29 in 0 : vector<4x32xf32>, vector<4x32xf32>, vector<4x32xf32>, vector<4x32xf32> -> vector<16x32xf32>
    %40 = tpu.concatenate %32, %32, %32, %32 in 0 : vector<4x32xf32>, vector<4x32xf32>, vector<4x32xf32>, vector<4x32xf32> -> vector<16x32xf32>
    %41 = tpu.concatenate %37, %37, %37, %37 in 0 : vector<4x32xf32>, vector<4x32xf32>, vector<4x32xf32>, vector<4x32xf32> -> vector<16x32xf32>
    %c0_24 = arith.constant 0 : index
    %c0_25 = arith.constant 0 : index
    %42 = vector.load %arg3[%c0_24, %c0_25] : memref<16x32xf32, #tpu.memory_space<vmem>>, vector<16x32xf32>
    %43 = arith.subf %42, %38 : vector<16x32xf32>
    %44 = math.absf %43 : vector<16x32xf32>
    %cst_26 = arith.constant 5.000000e-01 : f32
    %45 = vector.broadcast %cst_26 : f32 to vector<16x32xf32>
    %46 = arith.subf %44, %45 : vector<16x32xf32>
    %47 = arith.mulf %46, %39 : vector<16x32xf32>
    %48 = math.absf %47 : vector<16x32xf32>
    %cst_27 = arith.constant 0.000000e+00 : f32
    %49 = vector.broadcast %cst_27 : f32 to vector<16x32xf32>
    %50 = arith.cmpf olt, %47, %49 : vector<16x32xf32>
    %cst_28 = arith.constant 8.000000e+01 : f32
    %51 = vector.broadcast %cst_28 : f32 to vector<16x32xf32>
    %52 = arith.minimumf %48, %51 : vector<16x32xf32>
    %53 = arith.select %50, %52, %48 : vector<16x32xi1>, vector<16x32xf32>
    %cst_29 = arith.constant 0.000000e+00 : f32
    %54 = vector.broadcast %cst_29 : f32 to vector<16x32xf32>
    %55 = arith.subf %54, %53 : vector<16x32xf32>
    %56 = math.exp %55 : vector<16x32xf32>
    %cst_30 = arith.constant 0.000000e+00 : f32
    %57 = vector.broadcast %cst_30 : f32 to vector<16x32xf32>
    %58 = arith.cmpf olt, %47, %57 : vector<16x32xf32>
    %59 = arith.addf %56, %40 : vector<16x32xf32>
    %60 = arith.mulf %56, %40 : vector<16x32xf32>
    %cst_31 = arith.constant 1.000000e+00 : f32
    %61 = vector.broadcast %cst_31 : f32 to vector<16x32xf32>
    %62 = arith.addf %61, %60 : vector<16x32xf32>
    %63 = arith.select %58, %59, %62 : vector<16x32xi1>, vector<16x32xf32>
    %64 = arith.addf %53, %41 : vector<16x32xf32>
    %cst_32 = arith.constant 1.000000e+00 : f32
    %65 = vector.broadcast %cst_32 : f32 to vector<16x32xf32>
    %66 = arith.addf %65, %56 : vector<16x32xf32>
    %67 = arith.mulf %66, %63 : vector<16x32xf32>
    %68 = math.log %67 : vector<16x32xf32>
    %69 = arith.addf %64, %68 : vector<16x32xf32>
    %70 = vector.shape_cast %69 : vector<16x32xf32> to vector<1x16x32xf32>
    %cst_33 = arith.constant dense<0.000000e+00> : vector<1xf32>
    %71 = vector.multi_reduction <add>, %70, %cst_33 [1, 2] : vector<1x16x32xf32> to vector<1xf32>
    %72 = vector.shape_cast %71 : vector<1xf32> to vector<1x1x1xf32>
    %73 = vector.extract %72[0, 0, 0] : f32 from vector<1x1x1xf32>
    %cst_34 = arith.constant 1.44269502 : f32
    %74 = arith.mulf %73, %cst_34 : f32
    %c0_35 = arith.constant 0 : index
    %c0_36 = arith.constant 0 : index
    %75 = memref.load %arg10[%c0_35, %c0_36] : memref<1x1xf32, #tpu.memory_space<smem>>
    memref.store %74, %arg10[%c0_35, %c0_36] : memref<1x1xf32, #tpu.memory_space<smem>>
    return
  }
  func.func @transform_0(%arg0: i32) -> (i32, i32) {
    %c0_i32 = arith.constant 0 : i32
    %c0_i32_0 = arith.constant 0 : i32
    return %c0_i32, %arg0 : i32, i32
  }
  func.func @transform_1(%arg0: i32) -> (i32, i32) {
    %c0_i32 = arith.constant 0 : i32
    %c0_i32_0 = arith.constant 0 : i32
    return %c0_i32, %arg0 : i32, i32
  }
  func.func @transform_2(%arg0: i32) -> (i32, i32) {
    %c0_i32 = arith.constant 0 : i32
    %c0_i32_0 = arith.constant 0 : i32
    return %c0_i32, %arg0 : i32, i32
  }
  func.func @transform_3(%arg0: i32) -> (i32, i32) {
    %c0_i32 = arith.constant 0 : i32
    %c0_i32_0 = arith.constant 0 : i32
    %c0_i32_1 = arith.constant 0 : i32
    return %c0_i32, %c0_i32_0 : i32, i32
  }
  func.func @transform_4(%arg0: i32) -> (i32, i32) {
    %c0_i32 = arith.constant 0 : i32
    %c0_i32_0 = arith.constant 0 : i32
    %c0_i32_1 = arith.constant 0 : i32
    return %c0_i32, %c0_i32_0 : i32, i32
  }
  func.func @transform_5(%arg0: i32) -> (i32, i32) {
    %c0_i32 = arith.constant 0 : i32
    %c0_i32_0 = arith.constant 0 : i32
    %c0_i32_1 = arith.constant 0 : i32
    return %c0_i32, %c0_i32_0 : i32, i32
  }
  func.func @transform_6(%arg0: i32) -> (i32, i32) {
    %c0_i32 = arith.constant 0 : i32
    %c0_i32_0 = arith.constant 0 : i32
    %c0_i32_1 = arith.constant 0 : i32
    return %c0_i32, %c0_i32_0 : i32, i32
  }
  func.func @transform_7(%arg0: i32) -> (i32, i32) {
    %c0_i32 = arith.constant 0 : i32
    %c0_i32_0 = arith.constant 0 : i32
    %c0_i32_1 = arith.constant 0 : i32
    return %c0_i32, %c0_i32_0 : i32, i32
  }
  func.func @transform_8(%arg0: i32) -> (i32, i32) {
    %c0_i32 = arith.constant 0 : i32
    %c0_i32_0 = arith.constant 0 : i32
    return %c0_i32, %arg0 : i32, i32
  }
  func.func @transform_9(%arg0: i32) -> (i32, i32) {
    %c0_i32 = arith.constant 0 : i32
    %c0_i32_0 = arith.constant 0 : i32
    return %arg0, %c0_i32 : i32, i32
  }
}

module attributes {stable_mosaic.version = 11 : i64} {
  func.func @_decoder_kernel(%arg0: i32, %arg1: memref<4x128xf32, #tpu.memory_space<vmem>>, %arg2: memref<32x128xbf16, #tpu.memory_space<vmem>>, %arg3: memref<16x128xf32, #tpu.memory_space<vmem>>, %arg4: memref<32x4xbf16, #tpu.memory_space<vmem>>, %arg5: memref<32x32xbf16, #tpu.memory_space<vmem>>, %arg6: memref<32x1xf32, #tpu.memory_space<vmem>>, %arg7: memref<8x32xbf16, #tpu.memory_space<vmem>>, %arg8: memref<8x1xf32, #tpu.memory_space<vmem>>, %arg9: memref<1x1xf32, #tpu.memory_space<smem>>) attributes {dimension_semantics = [#tpu.dimension_semantics<parallel>], iteration_bounds = array<i64: 1>, scalar_prefetch = 0 : i64, scratch_operands = 0 : i64, tpu.core_type = #tpu.core_type<tc>, window_params = [{transform_indices = @transform_0, window_bounds = array<i64: 4, 128>}, {transform_indices = @transform_1, window_bounds = array<i64: 32, 128>}, {transform_indices = @transform_2, window_bounds = array<i64: 16, 128>}, {pipeline_mode = #tpu.pipeline_mode<synchronous>, transform_indices = @transform_3, window_bounds = array<i64: 32, 4>}, {pipeline_mode = #tpu.pipeline_mode<synchronous>, transform_indices = @transform_4, window_bounds = array<i64: 32, 32>}, {pipeline_mode = #tpu.pipeline_mode<synchronous>, transform_indices = @transform_5, window_bounds = array<i64: 32, 1>}, {pipeline_mode = #tpu.pipeline_mode<synchronous>, transform_indices = @transform_6, window_bounds = array<i64: 8, 32>}, {pipeline_mode = #tpu.pipeline_mode<synchronous>, transform_indices = @transform_7, window_bounds = array<i64: 8, 1>}, {transform_indices = @transform_8, window_bounds = array<i64: 1, 1>}]} {
    %c0 = arith.constant 0 : index
    %c0_0 = arith.constant 0 : index
    %0 = vector.load %arg1[%c0, %c0_0] : memref<4x128xf32, #tpu.memory_space<vmem>>, vector<4x128xf32>
    %c0_1 = arith.constant 0 : index
    %c0_2 = arith.constant 0 : index
    %1 = vector.load %arg4[%c0_1, %c0_2] : memref<32x4xbf16, #tpu.memory_space<vmem>>, vector<32x4xbf16>
    %2 = arith.truncf %0 : vector<4x128xf32> to vector<4x128xbf16>
    %cst = arith.constant dense<0.000000e+00> : vector<32x128xf32>
    %3 = tpu.matmul %1, %2, %cst {dimension_numbers = #tpu.dot_dimension_numbers<[1], [0], [0], [1], [0, 0, 1, 1], [], []>} : vector<32x4xbf16>, vector<4x128xbf16>, vector<32x128xf32> -> vector<32x128xf32>
    %c0_3 = arith.constant 0 : index
    %c0_4 = arith.constant 0 : index
    %4 = vector.load %arg5[%c0_3, %c0_4] : memref<32x32xbf16, #tpu.memory_space<vmem>>, vector<32x32xbf16>
    %c0_5 = arith.constant 0 : index
    %c0_6 = arith.constant 0 : index
    %5 = vector.load %arg2[%c0_5, %c0_6] : memref<32x128xbf16, #tpu.memory_space<vmem>>, vector<32x128xbf16>
    %cst_7 = arith.constant dense<0.000000e+00> : vector<32x128xf32>
    %6 = tpu.matmul %4, %5, %cst_7 {dimension_numbers = #tpu.dot_dimension_numbers<[1], [0], [0], [1], [0, 0, 1, 1], [], []>} : vector<32x32xbf16>, vector<32x128xbf16>, vector<32x128xf32> -> vector<32x128xf32>
    %7 = arith.addf %3, %6 : vector<32x128xf32>
    %c0_8 = arith.constant 0 : index
    %c0_9 = arith.constant 0 : index
    %8 = vector.load %arg6[%c0_8, %c0_9] : memref<32x1xf32, #tpu.memory_space<vmem>>, vector<32x1xf32>
    %9 = vector.broadcast %8 : vector<32x1xf32> to vector<32x128xf32>
    %10 = arith.addf %7, %9 : vector<32x128xf32>
    %cst_10 = arith.constant 0.000000e+00 : f32
    %11 = vector.broadcast %cst_10 : f32 to vector<32x128xf32>
    %12 = arith.maximumf %10, %11 : vector<32x128xf32>
    %13 = arith.truncf %12 : vector<32x128xf32> to vector<32x128xbf16>
    %c0_11 = arith.constant 0 : index
    %c0_12 = arith.constant 0 : index
    %14 = vector.load %arg7[%c0_11, %c0_12] : memref<8x32xbf16, #tpu.memory_space<vmem>>, vector<8x32xbf16>
    %cst_13 = arith.constant dense<0.000000e+00> : vector<8x128xf32>
    %15 = tpu.matmul %14, %13, %cst_13 {dimension_numbers = #tpu.dot_dimension_numbers<[1], [0], [0], [1], [0, 0, 1, 1], [], []>} : vector<8x32xbf16>, vector<32x128xbf16>, vector<8x128xf32> -> vector<8x128xf32>
    %c0_14 = arith.constant 0 : index
    %c0_15 = arith.constant 0 : index
    %16 = vector.load %arg8[%c0_14, %c0_15] : memref<8x1xf32, #tpu.memory_space<vmem>>, vector<8x1xf32>
    %17 = vector.broadcast %16 : vector<8x1xf32> to vector<8x128xf32>
    %18 = arith.addf %15, %17 : vector<8x128xf32>
    %19 = vector.extract_strided_slice %18 {offsets = [0, 0], sizes = [4, 128], strides = [1, 1]} : vector<8x128xf32> to vector<4x128xf32>
    %20 = arith.addf %19, %0 : vector<4x128xf32>
    %21 = vector.extract_strided_slice %18 {offsets = [4, 0], sizes = [4, 128], strides = [1, 1]} : vector<8x128xf32> to vector<4x128xf32>
    %cst_16 = arith.constant -8.000000e+00 : f32
    %cst_17 = arith.constant 8.000000e+00 : f32
    %22 = vector.broadcast %cst_16 : f32 to vector<4x128xf32>
    %23 = arith.maximumf %22, %21 : vector<4x128xf32>
    %24 = vector.broadcast %cst_17 : f32 to vector<4x128xf32>
    %25 = arith.minimumf %24, %23 : vector<4x128xf32>
    %cst_18 = arith.constant 0.000000e+00 : f32
    %26 = vector.broadcast %cst_18 : f32 to vector<4x128xf32>
    %27 = arith.subf %26, %25 : vector<4x128xf32>
    %28 = math.exp %27 : vector<4x128xf32>
    %cst_19 = arith.constant 0.000000e+00 : f32
    %29 = vector.broadcast %cst_19 : f32 to vector<4x128xf32>
    %30 = arith.subf %29, %28 : vector<4x128xf32>
    %31 = math.exp %30 : vector<4x128xf32>
    %cst_20 = arith.constant 1.000000e+00 : f32
    %32 = vector.broadcast %cst_20 : f32 to vector<4x128xf32>
    %33 = arith.subf %32, %31 : vector<4x128xf32>
    %34 = math.log %33 : vector<4x128xf32>
    %cst_21 = arith.constant 0.000000e+00 : f32
    %35 = vector.broadcast %cst_21 : f32 to vector<4x128xf32>
    %36 = arith.subf %35, %34 : vector<4x128xf32>
    %37 = tpu.concatenate %20, %20, %20, %20 in 0 : vector<4x128xf32>, vector<4x128xf32>, vector<4x128xf32>, vector<4x128xf32> -> vector<16x128xf32>
    %38 = tpu.concatenate %28, %28, %28, %28 in 0 : vector<4x128xf32>, vector<4x128xf32>, vector<4x128xf32>, vector<4x128xf32> -> vector<16x128xf32>
    %39 = tpu.concatenate %31, %31, %31, %31 in 0 : vector<4x128xf32>, vector<4x128xf32>, vector<4x128xf32>, vector<4x128xf32> -> vector<16x128xf32>
    %40 = tpu.concatenate %36, %36, %36, %36 in 0 : vector<4x128xf32>, vector<4x128xf32>, vector<4x128xf32>, vector<4x128xf32> -> vector<16x128xf32>
    %c0_22 = arith.constant 0 : index
    %c0_23 = arith.constant 0 : index
    %41 = vector.load %arg3[%c0_22, %c0_23] : memref<16x128xf32, #tpu.memory_space<vmem>>, vector<16x128xf32>
    %42 = arith.subf %41, %37 : vector<16x128xf32>
    %43 = math.absf %42 : vector<16x128xf32>
    %cst_24 = arith.constant 5.000000e-01 : f32
    %44 = vector.broadcast %cst_24 : f32 to vector<16x128xf32>
    %45 = arith.subf %43, %44 : vector<16x128xf32>
    %46 = arith.mulf %45, %38 : vector<16x128xf32>
    %47 = math.absf %46 : vector<16x128xf32>
    %cst_25 = arith.constant 0.000000e+00 : f32
    %48 = vector.broadcast %cst_25 : f32 to vector<16x128xf32>
    %49 = arith.cmpf olt, %46, %48 : vector<16x128xf32>
    %cst_26 = arith.constant 8.000000e+01 : f32
    %50 = vector.broadcast %cst_26 : f32 to vector<16x128xf32>
    %51 = arith.minimumf %47, %50 : vector<16x128xf32>
    %52 = arith.select %49, %51, %47 : vector<16x128xi1>, vector<16x128xf32>
    %cst_27 = arith.constant 0.000000e+00 : f32
    %53 = vector.broadcast %cst_27 : f32 to vector<16x128xf32>
    %54 = arith.subf %53, %52 : vector<16x128xf32>
    %55 = math.exp %54 : vector<16x128xf32>
    %cst_28 = arith.constant 0.000000e+00 : f32
    %56 = vector.broadcast %cst_28 : f32 to vector<16x128xf32>
    %57 = arith.cmpf olt, %46, %56 : vector<16x128xf32>
    %58 = arith.addf %55, %39 : vector<16x128xf32>
    %59 = arith.mulf %55, %39 : vector<16x128xf32>
    %cst_29 = arith.constant 1.000000e+00 : f32
    %60 = vector.broadcast %cst_29 : f32 to vector<16x128xf32>
    %61 = arith.addf %60, %59 : vector<16x128xf32>
    %62 = arith.select %57, %58, %61 : vector<16x128xi1>, vector<16x128xf32>
    %63 = arith.addf %52, %40 : vector<16x128xf32>
    %cst_30 = arith.constant 1.000000e+00 : f32
    %64 = vector.broadcast %cst_30 : f32 to vector<16x128xf32>
    %65 = arith.addf %64, %55 : vector<16x128xf32>
    %66 = arith.mulf %65, %62 : vector<16x128xf32>
    %67 = math.log %66 : vector<16x128xf32>
    %68 = arith.addf %63, %67 : vector<16x128xf32>
    %69 = vector.shape_cast %68 : vector<16x128xf32> to vector<1x16x128xf32>
    %cst_31 = arith.constant dense<0.000000e+00> : vector<1xf32>
    %70 = vector.multi_reduction <add>, %69, %cst_31 [1, 2] : vector<1x16x128xf32> to vector<1xf32>
    %71 = vector.shape_cast %70 : vector<1xf32> to vector<1x1x1xf32>
    %72 = vector.extract %71[0, 0, 0] : f32 from vector<1x1x1xf32>
    %cst_32 = arith.constant 1.44269502 : f32
    %73 = arith.mulf %72, %cst_32 : f32
    %c0_33 = arith.constant 0 : index
    %c0_34 = arith.constant 0 : index
    %74 = memref.load %arg9[%c0_33, %c0_34] : memref<1x1xf32, #tpu.memory_space<smem>>
    memref.store %73, %arg9[%c0_33, %c0_34] : memref<1x1xf32, #tpu.memory_space<smem>>
    return
  }
  func.func @transform_0(%arg0: i32) -> (i32, i32) {
    %c0_i32 = arith.constant 0 : i32
    %c0_i32_0 = arith.constant 0 : i32
    return %c0_i32, %arg0 : i32, i32
  }
  func.func @transform_1(%arg0: i32) -> (i32, i32) {
    %c0_i32 = arith.constant 0 : i32
    %c0_i32_0 = arith.constant 0 : i32
    return %c0_i32, %arg0 : i32, i32
  }
  func.func @transform_2(%arg0: i32) -> (i32, i32) {
    %c0_i32 = arith.constant 0 : i32
    %c0_i32_0 = arith.constant 0 : i32
    return %c0_i32, %arg0 : i32, i32
  }
  func.func @transform_3(%arg0: i32) -> (i32, i32) {
    %c0_i32 = arith.constant 0 : i32
    %c0_i32_0 = arith.constant 0 : i32
    %c0_i32_1 = arith.constant 0 : i32
    return %c0_i32, %c0_i32_0 : i32, i32
  }
  func.func @transform_4(%arg0: i32) -> (i32, i32) {
    %c0_i32 = arith.constant 0 : i32
    %c0_i32_0 = arith.constant 0 : i32
    %c0_i32_1 = arith.constant 0 : i32
    return %c0_i32, %c0_i32_0 : i32, i32
  }
  func.func @transform_5(%arg0: i32) -> (i32, i32) {
    %c0_i32 = arith.constant 0 : i32
    %c0_i32_0 = arith.constant 0 : i32
    %c0_i32_1 = arith.constant 0 : i32
    return %c0_i32, %c0_i32_0 : i32, i32
  }
  func.func @transform_6(%arg0: i32) -> (i32, i32) {
    %c0_i32 = arith.constant 0 : i32
    %c0_i32_0 = arith.constant 0 : i32
    %c0_i32_1 = arith.constant 0 : i32
    return %c0_i32, %c0_i32_0 : i32, i32
  }
  func.func @transform_7(%arg0: i32) -> (i32, i32) {
    %c0_i32 = arith.constant 0 : i32
    %c0_i32_0 = arith.constant 0 : i32
    %c0_i32_1 = arith.constant 0 : i32
    return %c0_i32, %c0_i32_0 : i32, i32
  }
  func.func @transform_8(%arg0: i32) -> (i32, i32) {
    %c0_i32 = arith.constant 0 : i32
    %c0_i32_0 = arith.constant 0 : i32
    return %arg0, %c0_i32 : i32, i32
  }
}

</mosaic_0001>

<llo_original>
// kernel: _forward_impl.4
$region0: #{_forward_impl.4}
  #allocation0 [shape = 'u32[]', space=smem, size = 0x4, offset = 0x4, fixed_abs, tag = 'smem constant byte address 0x4 - core index']
  #allocation1 [shape = 'u32[144,128]{1,0:T(1,128)}', space=vmem, size = 0x12000, scoped, tag = 'internal scratch']
  %s0 = inlined_call_operand.vmem [shape: f32[4,16,32], index: 0, kind: input, shape index: {}]
  %s1 = inlined_call_operand.vmem [shape: f32[16,16,8], index: 1, kind: output, shape index: {0}]
  %s2 = inlined_call_operand.vmem [shape: f32[4,16,8], index: 2, kind: output, shape index: {1}]
  %3 = xla_tuple %s1, %s2
  %s4 = sld [smem:[#allocation0]]
  $region151: #{_forward_impl.4} parent=0
    _
  %s6 = ssub.s32 1, %s4
  %s7 = scalar_select 0, %s6, %s4
  $region1: #{_forward_impl.4} parent=0
    #allocation2 [shape = 'u8[32768]{0}', space=vmem, size = 0x8000, scoped, tag = 'input window, operand 0']
    #allocation3 [shape = 'u8[131072]{0}', space=vmem, size = 0x20000, scoped, tag = 'output window, operand 0']
    #allocation4 [shape = 'u8[32768]{0}', space=vmem, size = 0x8000, scoped, tag = 'output window, operand 1']
    loop: start=0, step=1, limit=4
    $region2: #{_forward_impl.4} parent=1 // loop_pre_header
      _
    $region3: #{_forward_impl.4} parent=1 // loop_header
      %s9 = sphi 0, %s13
      %p10 = scmp.ge.s32.totalorder %s9, 4
      %s19 = sphi 0, %s21
      %s22 = sphi 0, %s19
      %s23 = sphi 0, %s22
      %s39 = sphi 0, %s23
      %s45 = sphi 0, %s47
      %s48 = sphi 0, %s45
      %s49 = sphi 0, %s48
      %s65 = sphi 0, %s49
      %s71 = sphi 0, %s73
      %s74 = sphi 0, %s71
      %s75 = sphi 0, %s74
      %s91 = sphi 0, %s75
    $region4: #{_forward_impl.4} parent=1 // loop_header_branch
      %12 = sbr.rel (%p10) target = $region8
    $region5: #{_forward_impl.4} parent=1 // loop_body
      %s14 = ssub.s32 %s9, 1
      %s15 = ssub.s32 %s9, 2
      %s16 = sadd.s32 %s9, 1
      %s17 = ssub.s32 %s9, %s16
      %p18 = scmp.eq.s32.totalorder %s17, 0
      %s20 = sadd.s32 %s19, 1
      %s21 = scalar_select %p18, %s19, %s20
      %p24 = pneg %p18
      %p25 = scmp.eq.s32.totalorder %s9, 1
      %p26 = por %p24, %p25
      %p27 = scmp.ne.s32.totalorder %s19, %s22
      %p28 = scmp.eq.s32.totalorder %s9, 0
      %p29 = por %p27, %p28
      %p30 = scmp.ne.s32.totalorder %s19, %s22
      %p31 = scmp.eq.s32.totalorder %s14, 1
      %p32 = por %p30, %p31
      %p33 = scmp.ne.s32.totalorder %s22, %s23
      %p34 = scmp.eq.s32.totalorder %s14, 0
      %p35 = por %p33, %p34
      %p36 = scmp.ne.s32.totalorder %s22, %s23
      %p37 = scmp.eq.s32.totalorder %s15, 1
      %p38 = por %p36, %p37
      %p40 = scmp.ne.s32.totalorder %s23, %s39
      %p41 = scmp.eq.s32.totalorder %s15, 0
      %p42 = por %p40, %p41
      %s43 = ssub.s32 %s9, %s16
      %p44 = scmp.eq.s32.totalorder %s43, 0
      %s46 = sadd.s32 %s45, 1
      %s47 = scalar_select %p44, %s45, %s46
      %p50 = pneg %p44
      %p51 = scmp.eq.s32.totalorder %s9, 1
      %p52 = por %p50, %p51
      %p53 = scmp.ne.s32.totalorder %s45, %s48
      %p54 = scmp.eq.s32.totalorder %s9, 0
      %p55 = por %p53, %p54
      %p56 = scmp.ne.s32.totalorder %s45, %s48
      %p57 = scmp.eq.s32.totalorder %s14, 1
      %p58 = por %p56, %p57
      %p59 = scmp.ne.s32.totalorder %s48, %s49
      %p60 = scmp.eq.s32.totalorder %s14, 0
      %p61 = por %p59, %p60
      %p62 = scmp.ne.s32.totalorder %s48, %s49
      %p63 = scmp.eq.s32.totalorder %s15, 1
      %p64 = por %p62, %p63
      %p66 = scmp.ne.s32.totalorder %s49, %s65
      %p67 = scmp.eq.s32.totalorder %s15, 0
      %p68 = por %p66, %p67
      %s69 = ssub.s32 %s9, %s16
      %p70 = scmp.eq.s32.totalorder %s69, 0
      %s72 = sadd.s32 %s71, 1
      %s73 = scalar_select %p70, %s71, %s72
      %p76 = pneg %p70
      %p77 = scmp.eq.s32.totalorder %s9, 1
      %p78 = por %p76, %p77
      %p79 = scmp.ne.s32.totalorder %s71, %s74
      %p80 = scmp.eq.s32.totalorder %s9, 0
      %p81 = por %p79, %p80
      %p82 = scmp.ne.s32.totalorder %s71, %s74
      %p83 = scmp.eq.s32.totalorder %s14, 1
      %p84 = por %p82, %p83
      %p85 = scmp.ne.s32.totalorder %s74, %s75
      %p86 = scmp.eq.s32.totalorder %s14, 0
      %p87 = por %p85, %p86
      %p88 = scmp.ne.s32.totalorder %s74, %s75
      %p89 = scmp.eq.s32.totalorder %s15, 1
      %p90 = por %p88, %p89
      %p92 = scmp.ne.s32.totalorder %s75, %s91
      %p93 = scmp.eq.s32.totalorder %s15, 0
      %p94 = por %p92, %p93
      %p95 = scmp.le.s32.totalorder 1, %s9
      %p96 = scmp.lt.s32.totalorder %s9, 3
      %p97 = pnand %p95, %p96
      %p98 = pneg %p97
      // Predicated region
      $region9: #{_forward_impl.4} parent=5 // pred_check
        _
      $region10: #{_forward_impl.4} parent=5 // pred_check_branch
        %100 = sbr.rel (%p97) target = $region12
      $region11: #{_forward_impl.4} parent=5 // pred_region
        %s101 = ssub.s32 %s9, 1
      $region12: #{_forward_impl.4} parent=5 // pred_fallthru
        _
      %p102 = scmp.lt.s32.totalorder %s9, 2
      // Predicated region
      $region13: #{_forward_impl.4} parent=5 // pred_check
        %p103 = pneg %p102
      $region14: #{_forward_impl.4} parent=5 // pred_check_branch
        %105 = sbr.rel (%p103) target = $region16
      $region15: #{_forward_impl.4} parent=5 // pred_region
        // Predicated region
        $region17: #{_forward_impl.4} parent=15 // pred_check
          %p106 = pneg %p29
        $region18: #{_forward_impl.4} parent=15 // pred_check_branch
          %108 = sbr.rel (%p106) target = $region20
        $region19: #{_forward_impl.4} parent=15 // pred_region
          %s109 = sand.u32 %s19, 1
          %s110 = sand.u32 %s19, 1
          %s111 = smul.addr %s110, 32
          %s112 = scalar_lea.vmem [#allocation2], %s111
          %s113 = smul.addr %s9, 8
          %s114 = scalar_lea.vmem %s0, %s113
          // Predicated region
          $region21: #{_forward_impl.4} parent=19 // pred_check
            _
          $region22: #{_forward_impl.4} parent=19 // pred_check_branch
            %116 = sbr.rel (0) target = $region24
          $region23: #{_forward_impl.4} parent=19 // pred_region
            // Predicated region
            $region25: #{_forward_impl.4} parent=23 // pred_check
              _
            $region26: #{_forward_impl.4} parent=23 // pred_check_branch
              %118 = sbr.rel (0) target = $region28
            $region27: #{_forward_impl.4} parent=23 // pred_region
              // Predicated region
              $region40: #{_forward_impl.4} parent=27 // pred_check
                _
              $region41: #{_forward_impl.4} parent=27 // pred_check_branch
                %139 = sbr.rel (0) target = $region43
              $region42: #{_forward_impl.4} parent=27 // pred_region
                loop: start=0, step=1, limit=1
                $region44: #{_forward_impl.4} parent=42 // loop_pre_header
                  _
                $region45: #{_forward_impl.4} parent=42 // loop_header
                  %s141 = sphi 0, %s145
                  %p142 = scmp.ge.s32.totalorder %s141, 1
                  %s146 = sphi %s114, %s114
                  %s147 = sphi %s112, %s112
                $region46: #{_forward_impl.4} parent=42 // loop_header_branch
                  %144 = sbr.rel (%p142) target = $region50
                $region47: #{_forward_impl.4} parent=42 // loop_body
                  %v148 = vld [vmem:[%s146] sm:$0xff]
                  %149 = vst [vmem:[%s147] sm:$0xff] %v148
                  %v150 = vld [vmem:[%s146 + $0x10] sm:$0xff]
                  %151 = vst [vmem:[%s147 + $0x8] sm:$0xff] %v150
                  %v152 = vld [vmem:[%s146 + $0x20] sm:$0xff]
                  %153 = vst [vmem:[%s147 + $0x10] sm:$0xff] %v152
                  %v154 = vld [vmem:[%s146 + $0x30] sm:$0xff]
                  %155 = vst [vmem:[%s147 + $0x18] sm:$0xff] %v154
                $region48: #{_forward_impl.4} parent=42 // loop_footer
                  %s145 = sadd.s32 1, %s141
                $region49: #{_forward_impl.4} parent=42 // loop_footer_branch
                  %140 = sbr.rel target = $region45
                $region50: #{_forward_impl.4} parent=42 // loop_exit
                  _
              $region43: #{_forward_impl.4} parent=27 // pred_fallthru
                _
              // Predicated region
              $region51: #{_forward_impl.4} parent=27 // pred_check
                _
              $region52: #{_forward_impl.4} parent=27 // pred_check_branch
                %157 = sbr.rel target = $region54
              $region53: #{_forward_impl.4} parent=27 // pred_region
                _
              $region54: #{_forward_impl.4} parent=27 // pred_fallthru
                _
            $region28: #{_forward_impl.4} parent=23 // pred_fallthru
              _
            // Predicated region
            $region29: #{_forward_impl.4} parent=23 // pred_check
              _
            $region30: #{_forward_impl.4} parent=23 // pred_check_branch
              %120 = sbr.rel target = $region32
            $region31: #{_forward_impl.4} parent=23 // pred_region
              loop: start=0, step=1, limit=1
              $region33: #{_forward_impl.4} parent=31 // loop_pre_header
                _
              $region34: #{_forward_impl.4} parent=31 // loop_header
                %s123 = sphi 0, %s127
                %p124 = scmp.ge.s32.totalorder %s123, 1
                %s128 = sphi %s114, %s114
                %s129 = sphi %s112, %s112
              $region35: #{_forward_impl.4} parent=31 // loop_header_branch
                %126 = sbr.rel (%p124) target = $region39
              $region36: #{_forward_impl.4} parent=31 // loop_body
                %v130 = vld [vmem:[%s128] sm:$0xff]
                %131 = vst [vmem:[%s129] sm:$0xff] %v130
                %v132 = vld [vmem:[%s128 + $0x10] sm:$0xff]
                %133 = vst [vmem:[%s129 + $0x8] sm:$0xff] %v132
                %v134 = vld [vmem:[%s128 + $0x20] sm:$0xff]
                %135 = vst [vmem:[%s129 + $0x10] sm:$0xff] %v134
                %v136 = vld [vmem:[%s128 + $0x30] sm:$0xff]
                %137 = vst [vmem:[%s129 + $0x18] sm:$0xff] %v136
              $region37: #{_forward_impl.4} parent=31 // loop_footer
                %s127 = sadd.s32 1, %s123
              $region38: #{_forward_impl.4} parent=31 // loop_footer_branch
                %122 = sbr.rel target = $region34
              $region39: #{_forward_impl.4} parent=31 // loop_exit
                _
            $region32: #{_forward_impl.4} parent=23 // pred_fallthru
              _
          $region24: #{_forward_impl.4} parent=19 // pred_fallthru
            _
          %158 = vnop
        $region20: #{_forward_impl.4} parent=15 // pred_fallthru
          _
      $region16: #{_forward_impl.4} parent=5 // pred_fallthru
        _
      %p159 = scmp.le.s32.totalorder 1, %s9
      %p160 = scmp.lt.s32.totalorder %s9, 3
      %p161 = pnand %p159, %p160
      %p162 = pneg %p161
      // Predicated region
      $region55: #{_forward_impl.4} parent=5 // pred_check
        _
      $region56: #{_forward_impl.4} parent=5 // pred_check_branch
        %164 = sbr.rel (%p161) target = $region58
      $region57: #{_forward_impl.4} parent=5 // pred_region
        %s165 = ssub.s32 %s9, 1
        %s166 = sand.u32 %s22, 1
        %s167 = sand.u32 %s22, 1
        %s168 = smul.addr %s167, 32
        %s169 = scalar_lea.vmem [#allocation2], %s168
        // Predicated region
        $region59: #{_forward_impl.4} parent=57 // pred_check
          %p170 = pneg %p35
        $region60: #{_forward_impl.4} parent=57 // pred_check_branch
          %172 = sbr.rel (%p170) target = $region62
        $region61: #{_forward_impl.4} parent=57 // pred_region
          _
        $region62: #{_forward_impl.4} parent=57 // pred_fallthru
          _
        %s173 = sand.u32 %s22, 1
        %s174 = sand.u32 %s22, 1
        %s175 = smul.addr %s174, 32
        %s176 = scalar_lea.vmem [#allocation2], %s175
        %p177 = pneg %p35
        %p178 = pneg %p32
        %p179 = pneg %p61
        %p180 = pneg %p58
        %s181 = sand.u32 %s48, 1
        %s182 = sand.u32 %s48, 1
        %s183 = smul.addr %s182, 128
        %s184 = scalar_lea.vmem [#allocation3], %s183
        %p185 = pneg %p87
        %p186 = pneg %p84
        %s187 = sand.u32 %s74, 1
        %s188 = sand.u32 %s74, 1
        %s189 = smul.addr %s188, 32
        %s190 = scalar_lea.vmem [#allocation4], %s189
        %v191 = vld [vmem:[%s169] sm:$0xff]
        %v192 = vld [vmem:[%s169 + $0x8] sm:$0xff]
        %v193 = vld [vmem:[%s169 + $0x10] sm:$0xff]
        %v194 = vld [vmem:[%s169 + $0x18] sm:$0xff]
        %199 = vrot.lane.b32.xlu0 %v191, 120
        %v200 = vpop.permute.xlu0 %199
        %201 = vrot.lane.b32.xlu0 %v192, 120
        %v202 = vpop.permute.xlu0 %201
        %203 = vrot.lane.b32.xlu0 %v193, 120
        %v204 = vpop.permute.xlu0 %203
        %205 = vrot.lane.b32.xlu0 %v194, 120
        %v206 = vpop.permute.xlu0 %205
        %211 = vrot.lane.b32.xlu0 %v191, 112
        %v212 = vpop.permute.xlu0 %211
        %213 = vrot.lane.b32.xlu0 %v192, 112
        %v214 = vpop.permute.xlu0 %213
        %215 = vrot.lane.b32.xlu0 %v193, 112
        %v216 = vpop.permute.xlu0 %215
        %217 = vrot.lane.b32.xlu0 %v194, 112
        %v218 = vpop.permute.xlu0 %217
        %223 = vrot.lane.b32.xlu0 %v191, 104
        %v224 = vpop.permute.xlu0 %223
        %225 = vrot.lane.b32.xlu0 %v192, 104
        %v226 = vpop.permute.xlu0 %225
        %227 = vrot.lane.b32.xlu0 %v193, 104
        %v228 = vpop.permute.xlu0 %227
        %229 = vrot.lane.b32.xlu0 %v194, 104
        %v230 = vpop.permute.xlu0 %229
        %vm235 = vcmask 64512
        %236 = vst.msk [vmem:[%s184] sm:$0xff] %vm235, %v191
        %237 = vst.msk [vmem:[%s184 + $0x8] sm:$0xff] %vm235, %v192
        %238 = vst.msk [vmem:[%s184 + $0x10] sm:$0xff] %vm235, %v193
        %239 = vst.msk [vmem:[%s184 + $0x18] sm:$0xff] %vm235, %v194
        %240 = vst.msk [vmem:[%s184 + $0x20] sm:$0xff] %vm235, %v200
        %241 = vst.msk [vmem:[%s184 + $0x28] sm:$0xff] %vm235, %v202
        %242 = vst.msk [vmem:[%s184 + $0x30] sm:$0xff] %vm235, %v204
        %243 = vst.msk [vmem:[%s184 + $0x38] sm:$0xff] %vm235, %v206
        %244 = vst.msk [vmem:[%s184 + $0x40] sm:$0xff] %vm235, %v212
        %245 = vst.msk [vmem:[%s184 + $0x48] sm:$0xff] %vm235, %v214
        %246 = vst.msk [vmem:[%s184 + $0x50] sm:$0xff] %vm235, %v216
        %247 = vst.msk [vmem:[%s184 + $0x58] sm:$0xff] %vm235, %v218
        %248 = vst.msk [vmem:[%s184 + $0x60] sm:$0xff] %vm235, %v224
        %249 = vst.msk [vmem:[%s184 + $0x68] sm:$0xff] %vm235, %v226
        %250 = vst.msk [vmem:[%s184 + $0x70] sm:$0xff] %vm235, %v228
        %251 = vst.msk [vmem:[%s184 + $0x78] sm:$0xff] %vm235, %v230
        %v252 = vadd.f32 %v191, %v200
        %v253 = vadd.f32 %v192, %v202
        %v254 = vadd.f32 %v193, %v204
        %v255 = vadd.f32 %v194, %v206
        %260 = vrot.lane.b32.xlu0 %v252, 112
        %v261 = vpop.permute.xlu0 %260
        %262 = vrot.lane.b32.xlu0 %v253, 112
        %v263 = vpop.permute.xlu0 %262
        %264 = vrot.lane.b32.xlu0 %v254, 112
        %v265 = vpop.permute.xlu0 %264
        %266 = vrot.lane.b32.xlu0 %v255, 112
        %v267 = vpop.permute.xlu0 %266
        %v272 = vadd.f32 %v252, %v261
        %v273 = vadd.f32 %v253, %v263
        %v274 = vadd.f32 %v254, %v265
        %v275 = vadd.f32 %v255, %v267
        %v276 = vmul.f32 %v272, 0.25
        %v277 = vmul.f32 %v273, 0.25
        %v278 = vmul.f32 %v274, 0.25
        %v279 = vmul.f32 %v275, 0.25
        %v280 = vround.ne.pseudo %v276
        %v281 = vround.ne.pseudo %v277
        %v282 = vround.ne.pseudo %v278
        %v283 = vround.ne.pseudo %v279
        %284 = vst.msk [vmem:[%s190] sm:$0xff] %vm235, %v280
        %285 = vst.msk [vmem:[%s190 + $0x8] sm:$0xff] %vm235, %v281
        %286 = vst.msk [vmem:[%s190 + $0x10] sm:$0xff] %vm235, %v282
        %287 = vst.msk [vmem:[%s190 + $0x18] sm:$0xff] %vm235, %v283
        %s288 = sand.u32 %s48, 1
        %s289 = sand.u32 %s48, 1
        %s290 = smul.addr %s289, 128
        %s291 = scalar_lea.vmem [#allocation3], %s290
        %s292 = sand.u32 %s74, 1
        %s293 = sand.u32 %s74, 1
        %s294 = smul.addr %s293, 32
        %s295 = scalar_lea.vmem [#allocation4], %s294
        // Predicated region
        $region63: #{_forward_impl.4} parent=57 // pred_check
          %p296 = pneg %p58
        $region64: #{_forward_impl.4} parent=57 // pred_check_branch
          %298 = sbr.rel (%p296) target = $region66
        $region65: #{_forward_impl.4} parent=57 // pred_region
          %s299 = smul.addr %s14, 8
          %s300 = scalar_lea.vmem %s1, %s299
          // Predicated region
          $region67: #{_forward_impl.4} parent=65 // pred_check
            _
          $region68: #{_forward_impl.4} parent=65 // pred_check_branch
            %302 = sbr.rel (0) target = $region70
          $region69: #{_forward_impl.4} parent=65 // pred_region
            // Predicated region
            $region71: #{_forward_impl.4} parent=69 // pred_check
              _
            $region72: #{_forward_impl.4} parent=69 // pred_check_branch
              %304 = sbr.rel (0) target = $region74
            $region73: #{_forward_impl.4} parent=69 // pred_region
              // Predicated region
              $region86: #{_forward_impl.4} parent=73 // pred_check
                _
              $region87: #{_forward_impl.4} parent=73 // pred_check_branch
                %349 = sbr.rel (0) target = $region89
              $region88: #{_forward_impl.4} parent=73 // pred_region
                loop: start=0, step=1, limit=1
                $region90: #{_forward_impl.4} parent=88 // loop_pre_header
                  _
                $region91: #{_forward_impl.4} parent=88 // loop_header
                  %s351 = sphi 0, %s355
                  %p352 = scmp.ge.s32.totalorder %s351, 1
                  %s356 = sphi %s291, %s291
                  %s357 = sphi %s300, %s300
                $region92: #{_forward_impl.4} parent=88 // loop_header_branch
                  %354 = sbr.rel (%p352) target = $region96
                $region93: #{_forward_impl.4} parent=88 // loop_body
                  %v358 = vld [vmem:[%s356] sm:$0xff]
                  %359 = vst [vmem:[%s357] sm:$0xff] %v358
                  %v360 = vld [vmem:[%s356 + $0x8] sm:$0xff]
                  %361 = vst [vmem:[%s357 + $0x10] sm:$0xff] %v360
                  %v362 = vld [vmem:[%s356 + $0x10] sm:$0xff]
                  %363 = vst [vmem:[%s357 + $0x20] sm:$0xff] %v362
                  %v364 = vld [vmem:[%s356 + $0x18] sm:$0xff]
                  %365 = vst [vmem:[%s357 + $0x30] sm:$0xff] %v364
                  %v366 = vld [vmem:[%s356 + $0x20] sm:$0xff]
                  %367 = vst [vmem:[%s357 + $0x40] sm:$0xff] %v366
                  %v368 = vld [vmem:[%s356 + $0x28] sm:$0xff]
                  %369 = vst [vmem:[%s357 + $0x50] sm:$0xff] %v368
                  %v370 = vld [vmem:[%s356 + $0x30] sm:$0xff]
                  %371 = vst [vmem:[%s357 + $0x60] sm:$0xff] %v370
                  %v372 = vld [vmem:[%s356 + $0x38] sm:$0xff]
                  %373 = vst [vmem:[%s357 + $0x70] sm:$0xff] %v372
                  %v374 = vld [vmem:[%s356 + $0x40] sm:$0xff]
                  %375 = vst [vmem:[%s357 + $0x80] sm:$0xff] %v374
                  %v376 = vld [vmem:[%s356 + $0x48] sm:$0xff]
                  %377 = vst [vmem:[%s357 + $0x90] sm:$0xff] %v376
                  %v378 = vld [vmem:[%s356 + $0x50] sm:$0xff]
                  %379 = vst [vmem:[%s357 + $0xa0] sm:$0xff] %v378
                  %v380 = vld [vmem:[%s356 + $0x58] sm:$0xff]
                  %381 = vst [vmem:[%s357 + $0xb0] sm:$0xff] %v380
                  %v382 = vld [vmem:[%s356 + $0x60] sm:$0xff]
                  %383 = vst [vmem:[%s357 + $0xc0] sm:$0xff] %v382
                  %v384 = vld [vmem:[%s356 + $0x68] sm:$0xff]
                  %385 = vst [vmem:[%s357 + $0xd0] sm:$0xff] %v384
                  %v386 = vld [vmem:[%s356 + $0x70] sm:$0xff]
                  %387 = vst [vmem:[%s357 + $0xe0] sm:$0xff] %v386
                  %v388 = vld [vmem:[%s356 + $0x78] sm:$0xff]
                  %389 = vst [vmem:[%s357 + $0xf0] sm:$0xff] %v388
                $region94: #{_forward_impl.4} parent=88 // loop_footer
                  %s355 = sadd.s32 1, %s351
                $region95: #{_forward_impl.4} parent=88 // loop_footer_branch
                  %350 = sbr.rel target = $region91
                $region96: #{_forward_impl.4} parent=88 // loop_exit
                  _
              $region89: #{_forward_impl.4} parent=73 // pred_fallthru
                _
              // Predicated region
              $region97: #{_forward_impl.4} parent=73 // pred_check
                _
              $region98: #{_forward_impl.4} parent=73 // pred_check_branch
                %391 = sbr.rel target = $region100
              $region99: #{_forward_impl.4} parent=73 // pred_region
                _
              $region100: #{_forward_impl.4} parent=73 // pred_fallthru
                _
            $region74: #{_forward_impl.4} parent=69 // pred_fallthru
              _
            // Predicated region
            $region75: #{_forward_impl.4} parent=69 // pred_check
              _
            $region76: #{_forward_impl.4} parent=69 // pred_check_branch
              %306 = sbr.rel target = $region78
            $region77: #{_forward_impl.4} parent=69 // pred_region
              loop: start=0, step=1, limit=1
              $region79: #{_forward_impl.4} parent=77 // loop_pre_header
                _
              $region80: #{_forward_impl.4} parent=77 // loop_header
                %s309 = sphi 0, %s313
                %p310 = scmp.ge.s32.totalorder %s309, 1
                %s314 = sphi %s291, %s291
                %s315 = sphi %s300, %s300
              $region81: #{_forward_impl.4} parent=77 // loop_header_branch
                %312 = sbr.rel (%p310) target = $region85
              $region82: #{_forward_impl.4} parent=77 // loop_body
                %v316 = vld [vmem:[%s314] sm:$0xff]
                %317 = vst [vmem:[%s315] sm:$0xff] %v316
                %v318 = vld [vmem:[%s314 + $0x8] sm:$0xff]
                %319 = vst [vmem:[%s315 + $0x10] sm:$0xff] %v318
                %v320 = vld [vmem:[%s314 + $0x10] sm:$0xff]
                %321 = vst [vmem:[%s315 + $0x20] sm:$0xff] %v320
                %v322 = vld [vmem:[%s314 + $0x18] sm:$0xff]
                %323 = vst [vmem:[%s315 + $0x30] sm:$0xff] %v322
                %v324 = vld [vmem:[%s314 + $0x20] sm:$0xff]
                %325 = vst [vmem:[%s315 + $0x40] sm:$0xff] %v324
                %v326 = vld [vmem:[%s314 + $0x28] sm:$0xff]
                %327 = vst [vmem:[%s315 + $0x50] sm:$0xff] %v326
                %v328 = vld [vmem:[%s314 + $0x30] sm:$0xff]
                %329 = vst [vmem:[%s315 + $0x60] sm:$0xff] %v328
                %v330 = vld [vmem:[%s314 + $0x38] sm:$0xff]
                %331 = vst [vmem:[%s315 + $0x70] sm:$0xff] %v330
                %v332 = vld [vmem:[%s314 + $0x40] sm:$0xff]
                %333 = vst [vmem:[%s315 + $0x80] sm:$0xff] %v332
                %v334 = vld [vmem:[%s314 + $0x48] sm:$0xff]
                %335 = vst [vmem:[%s315 + $0x90] sm:$0xff] %v334
                %v336 = vld [vmem:[%s314 + $0x50] sm:$0xff]
                %337 = vst [vmem:[%s315 + $0xa0] sm:$0xff] %v336
                %v338 = vld [vmem:[%s314 + $0x58] sm:$0xff]
                %339 = vst [vmem:[%s315 + $0xb0] sm:$0xff] %v338
                %v340 = vld [vmem:[%s314 + $0x60] sm:$0xff]
                %341 = vst [vmem:[%s315 + $0xc0] sm:$0xff] %v340
                %v342 = vld [vmem:[%s314 + $0x68] sm:$0xff]
                %343 = vst [vmem:[%s315 + $0xd0] sm:$0xff] %v342
                %v344 = vld [vmem:[%s314 + $0x70] sm:$0xff]
                %345 = vst [vmem:[%s315 + $0xe0] sm:$0xff] %v344
                %v346 = vld [vmem:[%s314 + $0x78] sm:$0xff]
                %347 = vst [vmem:[%s315 + $0xf0] sm:$0xff] %v346
              $region83: #{_forward_impl.4} parent=77 // loop_footer
                %s313 = sadd.s32 1, %s309
              $region84: #{_forward_impl.4} parent=77 // loop_footer_branch
                %308 = sbr.rel target = $region80
              $region85: #{_forward_impl.4} parent=77 // loop_exit
                _
            $region78: #{_forward_impl.4} parent=69 // pred_fallthru
              _
          $region70: #{_forward_impl.4} parent=65 // pred_fallthru
            _
          %392 = vnop
        $region66: #{_forward_impl.4} parent=57 // pred_fallthru
          _
        // Predicated region
        $region101: #{_forward_impl.4} parent=57 // pred_check
          %p393 = pneg %p84
        $region102: #{_forward_impl.4} parent=57 // pred_check_branch
          %395 = sbr.rel (%p393) target = $region104
        $region103: #{_forward_impl.4} parent=57 // pred_region
          %s396 = smul.addr %s14, 8
          %s397 = scalar_lea.vmem %s2, %s396
          // Predicated region
          $region105: #{_forward_impl.4} parent=103 // pred_check
            _
          $region106: #{_forward_impl.4} parent=103 // pred_check_branch
            %399 = sbr.rel (0) target = $region108
          $region107: #{_forward_impl.4} parent=103 // pred_region
            // Predicated region
            $region109: #{_forward_impl.4} parent=107 // pred_check
              _
            $region110: #{_forward_impl.4} parent=107 // pred_check_branch
              %401 = sbr.rel (0) target = $region112
            $region111: #{_forward_impl.4} parent=107 // pred_region
              // Predicated region
              $region124: #{_forward_impl.4} parent=111 // pred_check
                _
              $region125: #{_forward_impl.4} parent=111 // pred_check_branch
                %422 = sbr.rel (0) target = $region127
              $region126: #{_forward_impl.4} parent=111 // pred_region
                loop: start=0, step=1, limit=1
                $region128: #{_forward_impl.4} parent=126 // loop_pre_header
                  _
                $region129: #{_forward_impl.4} parent=126 // loop_header
                  %s424 = sphi 0, %s428
                  %p425 = scmp.ge.s32.totalorder %s424, 1
                  %s429 = sphi %s295, %s295
                  %s430 = sphi %s397, %s397
                $region130: #{_forward_impl.4} parent=126 // loop_header_branch
                  %427 = sbr.rel (%p425) target = $region134
                $region131: #{_forward_impl.4} parent=126 // loop_body
                  %v431 = vld [vmem:[%s429] sm:$0xff]
                  %432 = vst [vmem:[%s430] sm:$0xff] %v431
                  %v433 = vld [vmem:[%s429 + $0x8] sm:$0xff]
                  %434 = vst [vmem:[%s430 + $0x10] sm:$0xff] %v433
                  %v435 = vld [vmem:[%s429 + $0x10] sm:$0xff]
                  %436 = vst [vmem:[%s430 + $0x20] sm:$0xff] %v435
                  %v437 = vld [vmem:[%s429 + $0x18] sm:$0xff]
                  %438 = vst [vmem:[%s430 + $0x30] sm:$0xff] %v437
                $region132: #{_forward_impl.4} parent=126 // loop_footer
                  %s428 = sadd.s32 1, %s424
                $region133: #{_forward_impl.4} parent=126 // loop_footer_branch
                  %423 = sbr.rel target = $region129
                $region134: #{_forward_impl.4} parent=126 // loop_exit
                  _
              $region127: #{_forward_impl.4} parent=111 // pred_fallthru
                _
              // Predicated region
              $region135: #{_forward_impl.4} parent=111 // pred_check
                _
              $region136: #{_forward_impl.4} parent=111 // pred_check_branch
                %440 = sbr.rel target = $region138
              $region137: #{_forward_impl.4} parent=111 // pred_region
                _
              $region138: #{_forward_impl.4} parent=111 // pred_fallthru
                _
            $region112: #{_forward_impl.4} parent=107 // pred_fallthru
              _
            // Predicated region
            $region113: #{_forward_impl.4} parent=107 // pred_check
              _
            $region114: #{_forward_impl.4} parent=107 // pred_check_branch
              %403 = sbr.rel target = $region116
            $region115: #{_forward_impl.4} parent=107 // pred_region
              loop: start=0, step=1, limit=1
              $region117: #{_forward_impl.4} parent=115 // loop_pre_header
                _
              $region118: #{_forward_impl.4} parent=115 // loop_header
                %s406 = sphi 0, %s410
                %p407 = scmp.ge.s32.totalorder %s406, 1
                %s411 = sphi %s295, %s295
                %s412 = sphi %s397, %s397
              $region119: #{_forward_impl.4} parent=115 // loop_header_branch
                %409 = sbr.rel (%p407) target = $region123
              $region120: #{_forward_impl.4} parent=115 // loop_body
                %v413 = vld [vmem:[%s411] sm:$0xff]
                %414 = vst [vmem:[%s412] sm:$0xff] %v413
                %v415 = vld [vmem:[%s411 + $0x8] sm:$0xff]
                %416 = vst [vmem:[%s412 + $0x10] sm:$0xff] %v415
                %v417 = vld [vmem:[%s411 + $0x10] sm:$0xff]
                %418 = vst [vmem:[%s412 + $0x20] sm:$0xff] %v417
                %v419 = vld [vmem:[%s411 + $0x18] sm:$0xff]
                %420 = vst [vmem:[%s412 + $0x30] sm:$0xff] %v419
              $region121: #{_forward_impl.4} parent=115 // loop_footer
                %s410 = sadd.s32 1, %s406
              $region122: #{_forward_impl.4} parent=115 // loop_footer_branch
                %405 = sbr.rel target = $region118
              $region123: #{_forward_impl.4} parent=115 // loop_exit
                _
            $region116: #{_forward_impl.4} parent=107 // pred_fallthru
              _
          $region108: #{_forward_impl.4} parent=103 // pred_fallthru
            _
          %441 = vnop
        $region104: #{_forward_impl.4} parent=57 // pred_fallthru
          _
      $region58: #{_forward_impl.4} parent=5 // pred_fallthru
        _
      %p442 = scmp.le.s32.totalorder 2, %s9
      // Predicated region
      $region139: #{_forward_impl.4} parent=5 // pred_check
        %p443 = pneg %p442
      $region140: #{_forward_impl.4} parent=5 // pred_check_branch
        %445 = sbr.rel (%p443) target = $region142
      $region141: #{_forward_impl.4} parent=5 // pred_region
        %s446 = ssub.s32 %s9, 2
        // Predicated region
        $region143: #{_forward_impl.4} parent=141 // pred_check
          %p447 = pneg %p64
        $region144: #{_forward_impl.4} parent=141 // pred_check_branch
          %449 = sbr.rel (%p447) target = $region146
        $region145: #{_forward_impl.4} parent=141 // pred_region
          %s450 = sand.u32 %s49, 1
          %s451 = sand.u32 %s49, 1
          %s452 = smul.addr %s451, 128
          %s453 = scalar_lea.vmem [#allocation3], %s452
        $region146: #{_forward_impl.4} parent=141 // pred_fallthru
          _
        // Predicated region
        $region147: #{_forward_impl.4} parent=141 // pred_check
          %p454 = pneg %p90
        $region148: #{_forward_impl.4} parent=141 // pred_check_branch
          %456 = sbr.rel (%p454) target = $region150
        $region149: #{_forward_impl.4} parent=141 // pred_region
          %s457 = sand.u32 %s75, 1
          %s458 = sand.u32 %s75, 1
          %s459 = smul.addr %s458, 32
          %s460 = scalar_lea.vmem [#allocation4], %s459
        $region150: #{_forward_impl.4} parent=141 // pred_fallthru
          _
      $region142: #{_forward_impl.4} parent=5 // pred_fallthru
        _
    $region6: #{_forward_impl.4} parent=1 // loop_footer
      %s13 = sadd.s32 1, %s9
    $region7: #{_forward_impl.4} parent=1 // loop_footer_branch
      %8 = sbr.rel target = $region3
    $region8: #{_forward_impl.4} parent=1 // loop_exit
      _

// kernel: _forward_impl.5
$region0: #{_forward_impl.5}
  #allocation0 [shape = 'u32[]', space=smem, size = 0x4, offset = 0x4, fixed_abs, tag = 'smem constant byte address 0x4 - core index']
  #allocation1 [shape = 'u32[144,128]{1,0:T(1,128)}', space=vmem, size = 0x12000, scoped, tag = 'internal scratch']
  %s0 = inlined_call_operand.vmem [shape: f32[4,8,16], index: 0, kind: input, shape index: {}]
  %s1 = inlined_call_operand.vmem [shape: f32[4,1], index: 1, kind: input, shape index: {}]
  %s2 = inlined_call_operand.vmem [shape: f32[4,1], index: 2, kind: input, shape index: {}]
  %s3 = inlined_call_operand.vmem [shape: f32[16,8,4], index: 3, kind: output, shape index: {0}]
  %s4 = inlined_call_operand.vmem [shape: f32[4,8,4], index: 4, kind: output, shape index: {1}]
  %s5 = inlined_call_operand.hbm [shape: f32[1,1], index: 5, kind: output, shape index: {2}]
  %6 = xla_tuple %s3, %s4, %s5
  %s7 = sld [smem:[#allocation0]]
  $region38: #{_forward_impl.5} parent=0
    _
  %s9 = ssub.s32 1, %s7
  %s10 = scalar_select 0, %s9, %s7
  $region1: #{_forward_impl.5} parent=0
    #allocation2 [shape = 'u8[512]{0}', space=smem, size = 0x200, scoped, tag = 'output window, operand 2, single buffered']
    #allocation3 [shape = 's32[1]{0}', space=sflag, size = 0x4, scoped, tag = 'scoped memory for _forward_impl.5']
    %11 = vsyncpa [#allocation3], 0
    // Predicated region
    $region2: #{_forward_impl.5} parent=1 // pred_check
      _
    $region3: #{_forward_impl.5} parent=1 // pred_check_branch
      %13 = sbr.rel (0) target = $region5
    $region4: #{_forward_impl.5} parent=1 // pred_region
      _
    $region5: #{_forward_impl.5} parent=1 // pred_fallthru
      _
    // Predicated region
    $region6: #{_forward_impl.5} parent=1 // pred_check
      _
    $region7: #{_forward_impl.5} parent=1 // pred_check_branch
      %15 = sbr.rel (0) target = $region9
    $region8: #{_forward_impl.5} parent=1 // pred_region
      _
    $region9: #{_forward_impl.5} parent=1 // pred_fallthru
      _
    // Predicated region
    $region10: #{_forward_impl.5} parent=1 // pred_check
      _
    $region11: #{_forward_impl.5} parent=1 // pred_check_branch
      %17 = sbr.rel (0) target = $region13
    $region12: #{_forward_impl.5} parent=1 // pred_region
      _
    $region13: #{_forward_impl.5} parent=1 // pred_fallthru
      _
    %v18 = vld [vmem:[%s0] sm:$0xff]
    %v19 = vld [vmem:[%s0 + $0x8] sm:$0xff]
    %v20 = vld [vmem:[%s0 + $0x10] sm:$0xff]
    %v21 = vld [vmem:[%s0 + $0x18] sm:$0xff]
    %26 = vrot.lane.b32.xlu0 %v18, 124
    %v27 = vpop.permute.xlu0 %26
    %28 = vrot.lane.b32.xlu0 %v19, 124
    %v29 = vpop.permute.xlu0 %28
    %30 = vrot.lane.b32.xlu0 %v20, 124
    %v31 = vpop.permute.xlu0 %30
    %32 = vrot.lane.b32.xlu0 %v21, 124
    %v33 = vpop.permute.xlu0 %32
    %38 = vrot.lane.b32.xlu0 %v18, 120
    %v39 = vpop.permute.xlu0 %38
    %40 = vrot.lane.b32.xlu0 %v19, 120
    %v41 = vpop.permute.xlu0 %40
    %42 = vrot.lane.b32.xlu0 %v20, 120
    %v43 = vpop.permute.xlu0 %42
    %44 = vrot.lane.b32.xlu0 %v21, 120
    %v45 = vpop.permute.xlu0 %44
    %50 = vrot.lane.b32.xlu0 %v18, 116
    %v51 = vpop.permute.xlu0 %50
    %52 = vrot.lane.b32.xlu0 %v19, 116
    %v53 = vpop.permute.xlu0 %52
    %54 = vrot.lane.b32.xlu0 %v20, 116
    %v55 = vpop.permute.xlu0 %54
    %56 = vrot.lane.b32.xlu0 %v21, 116
    %v57 = vpop.permute.xlu0 %56
    %vm62 = vcmask 31744
    %63 = vst.msk [vmem:[%s3] sm:$0xff] %vm62, %v18
    %64 = vst.msk [vmem:[%s3 + $0x8] sm:$0xff] %vm62, %v19
    %65 = vst.msk [vmem:[%s3 + $0x10] sm:$0xff] %vm62, %v20
    %66 = vst.msk [vmem:[%s3 + $0x18] sm:$0xff] %vm62, %v21
    %67 = vst.msk [vmem:[%s3 + $0x20] sm:$0xff] %vm62, %v27
    %68 = vst.msk [vmem:[%s3 + $0x28] sm:$0xff] %vm62, %v29
    %69 = vst.msk [vmem:[%s3 + $0x30] sm:$0xff] %vm62, %v31
    %70 = vst.msk [vmem:[%s3 + $0x38] sm:$0xff] %vm62, %v33
    %71 = vst.msk [vmem:[%s3 + $0x40] sm:$0xff] %vm62, %v39
    %72 = vst.msk [vmem:[%s3 + $0x48] sm:$0xff] %vm62, %v41
    %73 = vst.msk [vmem:[%s3 + $0x50] sm:$0xff] %vm62, %v43
    %74 = vst.msk [vmem:[%s3 + $0x58] sm:$0xff] %vm62, %v45
    %75 = vst.msk [vmem:[%s3 + $0x60] sm:$0xff] %vm62, %v51
    %76 = vst.msk [vmem:[%s3 + $0x68] sm:$0xff] %vm62, %v53
    %77 = vst.msk [vmem:[%s3 + $0x70] sm:$0xff] %vm62, %v55
    %78 = vst.msk [vmem:[%s3 + $0x78] sm:$0xff] %vm62, %v57
    %v79 = vadd.f32 %v18, %v27
    %v80 = vadd.f32 %v19, %v29
    %v81 = vadd.f32 %v20, %v31
    %v82 = vadd.f32 %v21, %v33
    %87 = vrot.lane.b32.xlu0 %v79, 120
    %v88 = vpop.permute.xlu0 %87
    %89 = vrot.lane.b32.xlu0 %v80, 120
    %v90 = vpop.permute.xlu0 %89
    %91 = vrot.lane.b32.xlu0 %v81, 120
    %v92 = vpop.permute.xlu0 %91
    %93 = vrot.lane.b32.xlu0 %v82, 120
    %v94 = vpop.permute.xlu0 %93
    %v99 = vadd.f32 %v79, %v88
    %v100 = vadd.f32 %v80, %v90
    %v101 = vadd.f32 %v81, %v92
    %v102 = vadd.f32 %v82, %v94
    %v103 = vmul.f32 %v99, 0.25
    %v104 = vmul.f32 %v100, 0.25
    %v105 = vmul.f32 %v101, 0.25
    %v106 = vmul.f32 %v102, 0.25
    %v107 = vround.ne.pseudo %v103
    %v108 = vround.ne.pseudo %v104
    %v109 = vround.ne.pseudo %v105
    %v110 = vround.ne.pseudo %v106
    %111 = vst.msk [vmem:[%s4] sm:$0xff] %vm62, %v107
    %112 = vst.msk [vmem:[%s4 + $0x8] sm:$0xff] %vm62, %v108
    %113 = vst.msk [vmem:[%s4 + $0x10] sm:$0xff] %vm62, %v109
    %114 = vst.msk [vmem:[%s4 + $0x18] sm:$0xff] %vm62, %v110
    %v115 = vld [vmem:[%s1] sm:$0xf]
    %v118 = vunpack.c.l.s4 1966171168
    %v119 = vunpack.c.0.s8 %v118
    %v120 = vlaneseq
    %v121 = vshrl.u32 %v120, 7
    %v122 = vsub.s32 %v119, %v121
    %v123 = vrot.slane %v115, %v122
    %v124 = vcombine.high %v123, %v123
    %v126 = vunpack.c.l.s4 1966171168
    %v127 = vunpack.c.0.s8 %v126
    %v128 = vlaneseq
    %v129 = vshrl.u32 %v128, 7
    %v130 = vsub.s32 %v127, %v129
    %v131 = vrot.slane %v123, %v130
    %v133 = vunpack.c.l.s4 1966171168
    %v134 = vunpack.c.0.s8 %v133
    %v135 = vlaneseq
    %v136 = vshrl.u32 %v135, 7
    %v137 = vsub.s32 %v134, %v136
    %v138 = vrot.slane %v124, %v137
    %v139 = vcombine.high %v131, %v131
    %v140 = vcombine.high %v138, %v138
    %v141 = vld [vmem:[%s2] sm:$0xf]
    %v142 = vsub.f32 0.0, %v141
    %v143 = vmul.f32 %v142, 1.442695
    %v144 = vpow.pop %v143
    %v147 = vunpack.c.l.s4 1966171168
    %v148 = vunpack.c.0.s8 %v147
    %v149 = vlaneseq
    %v150 = vshrl.u32 %v149, 7
    %v151 = vsub.s32 %v148, %v150
    %v152 = vrot.slane %v144, %v151
    %v153 = vcombine.high %v152, %v152
    %v155 = vunpack.c.l.s4 1966171168
    %v156 = vunpack.c.0.s8 %v155
    %v157 = vlaneseq
    %v158 = vshrl.u32 %v157, 7
    %v159 = vsub.s32 %v156, %v158
    %v160 = vrot.slane %v152, %v159
    %v162 = vunpack.c.l.s4 1966171168
    %v163 = vunpack.c.0.s8 %v162
    %v164 = vlaneseq
    %v165 = vshrl.u32 %v164, 7
    %v166 = vsub.s32 %v163, %v165
    %v167 = vrot.slane %v153, %v166
    %v168 = vcombine.high %v160, %v160
    %v169 = vcombine.high %v167, %v167
    %v174 = vsub.f32 0.0, %v160
    %v175 = vsub.f32 0.0, %v167
    %v176 = vsub.f32 0.0, %v168
    %v177 = vsub.f32 0.0, %v169
    %v178 = vmul.f32 %v174, 1.442695
    %v179 = vpow.pop %v178
    %v180 = vmul.f32 %v175, 1.442695
    %v181 = vpow.pop %v180
    %v182 = vmul.f32 %v176, 1.442695
    %v183 = vpow.pop %v182
    %v184 = vmul.f32 %v177, 1.442695
    %v185 = vpow.pop %v184
    %v186 = vsub.f32 1.0, %v179
    %v187 = vsub.f32 1.0, %v181
    %v188 = vsub.f32 1.0, %v183
    %v189 = vsub.f32 1.0, %v185
    %v190 = vlog2.pop %v186
    %v191 = vmul.f32 %v190, 0.6931472
    %v192 = vlog2.pop %v187
    %v193 = vmul.f32 %v192, 0.6931472
    %v194 = vlog2.pop %v188
    %v195 = vmul.f32 %v194, 0.6931472
    %v196 = vlog2.pop %v189
    %v197 = vmul.f32 %v196, 0.6931472
    %v198 = vsub.f32 0.0, %v191
    %v199 = vsub.f32 0.0, %v193
    %v200 = vsub.f32 0.0, %v195
    %v201 = vsub.f32 0.0, %v197
    %v202 = vlaneseq
    %v203 = vshrl.u32 %v202, 7
    %v204 = vsub.s32 0, %v203
    %v205 = vrot.slane %v131, %v204
    %v206 = vlaneseq
    %v207 = vshrl.u32 %v206, 7
    %v208 = vsub.s32 0, %v207
    %v209 = vrot.slane %v138, %v208
    %v210 = vlaneseq
    %v211 = vshrl.u32 %v210, 7
    %v212 = vsub.s32 0, %v211
    %v213 = vrot.slane %v139, %v212
    %v214 = vlaneseq
    %v215 = vshrl.u32 %v214, 7
    %v216 = vsub.s32 0, %v215
    %v217 = vrot.slane %v140, %v216
    %218 = vset.pattern.permute.xlu0 0
    %219 = vperm.xlu0 %218, %v205
    %v220 = vpop.permute.xlu0 %219
    %222 = vset.pattern.permute.xlu0 0
    %223 = vperm.xlu0 %222, %v209
    %v224 = vpop.permute.xlu0 %223
    %226 = vset.pattern.permute.xlu0 0
    %227 = vperm.xlu0 %226, %v213
    %v228 = vpop.permute.xlu0 %227
    %230 = vset.pattern.permute.xlu0 0
    %231 = vperm.xlu0 %230, %v217
    %v232 = vpop.permute.xlu0 %231
    %v234 = vsub.f32 %v107, %v220
    %v235 = vsub.f32 %v108, %v224
    %v236 = vsub.f32 %v109, %v228
    %v237 = vsub.f32 %v110, %v232
    %v238 = vand.u32 2147483647, %v234
    %v239 = vand.u32 2147483647, %v235
    %v240 = vand.u32 2147483647, %v236
    %v241 = vand.u32 2147483647, %v237
    %v242 = vsub.f32 %v238, 0.5
    %v243 = vsub.f32 %v239, 0.5
    %v244 = vsub.f32 %v240, 0.5
    %v245 = vsub.f32 %v241, 0.5
    %v246 = vlaneseq
    %v247 = vshrl.u32 %v246, 7
    %v248 = vsub.s32 0, %v247
    %v249 = vrot.slane %v160, %v248
    %v250 = vlaneseq
    %v251 = vshrl.u32 %v250, 7
    %v252 = vsub.s32 0, %v251
    %v253 = vrot.slane %v167, %v252
    %v254 = vlaneseq
    %v255 = vshrl.u32 %v254, 7
    %v256 = vsub.s32 0, %v255
    %v257 = vrot.slane %v168, %v256
    %v258 = vlaneseq
    %v259 = vshrl.u32 %v258, 7
    %v260 = vsub.s32 0, %v259
    %v261 = vrot.slane %v169, %v260
    %262 = vset.pattern.permute.xlu0 0
    %263 = vperm.xlu0 %262, %v249
    %v264 = vpop.permute.xlu0 %263
    %266 = vset.pattern.permute.xlu0 0
    %267 = vperm.xlu0 %266, %v253
    %v268 = vpop.permute.xlu0 %267
    %270 = vset.pattern.permute.xlu0 0
    %271 = vperm.xlu0 %270, %v257
    %v272 = vpop.permute.xlu0 %271
    %274 = vset.pattern.permute.xlu0 0
    %275 = vperm.xlu0 %274, %v261
    %v276 = vpop.permute.xlu0 %275
    %v278 = vmul.f32 %v242, %v264
    %v279 = vmul.f32 %v243, %v268
    %v280 = vmul.f32 %v244, %v272
    %v281 = vmul.f32 %v245, %v276
    %v282 = vand.u32 2147483647, %v278
    %v283 = vand.u32 2147483647, %v279
    %v284 = vand.u32 2147483647, %v280
    %v285 = vand.u32 2147483647, %v281
    %vm286 = vcmp.lt.f32.partialorder %v278, 0.0
    %vm287 = vcmp.lt.f32.partialorder %v279, 0.0
    %vm288 = vcmp.lt.f32.partialorder %v280, 0.0
    %vm289 = vcmp.lt.f32.partialorder %v281, 0.0
    %v290 = vmin.f32 %v282, 80.0
    %v291 = vmin.f32 %v283, 80.0
    %v292 = vmin.f32 %v284, 80.0
    %v293 = vmin.f32 %v285, 80.0
    %v294 = vsel %vm286, %v290, %v282
    %v295 = vsel %vm287, %v291, %v283
    %v296 = vsel %vm288, %v292, %v284
    %v297 = vsel %vm289, %v293, %v285
    %v298 = vsub.f32 0.0, %v294
    %v299 = vsub.f32 0.0, %v295
    %v300 = vsub.f32 0.0, %v296
    %v301 = vsub.f32 0.0, %v297
    %v302 = vmul.f32 %v298, 1.442695
    %v303 = vpow.pop %v302
    %v304 = vmul.f32 %v299, 1.442695
    %v305 = vpow.pop %v304
    %v306 = vmul.f32 %v300, 1.442695
    %v307 = vpow.pop %v306
    %v308 = vmul.f32 %v301, 1.442695
    %v309 = vpow.pop %v308
    %v314 = vlaneseq
    %v315 = vshrl.u32 %v314, 7
    %v316 = vsub.s32 0, %v315
    %v317 = vrot.slane %v179, %v316
    %v318 = vlaneseq
    %v319 = vshrl.u32 %v318, 7
    %v320 = vsub.s32 0, %v319
    %v321 = vrot.slane %v181, %v320
    %v322 = vlaneseq
    %v323 = vshrl.u32 %v322, 7
    %v324 = vsub.s32 0, %v323
    %v325 = vrot.slane %v183, %v324
    %v326 = vlaneseq
    %v327 = vshrl.u32 %v326, 7
    %v328 = vsub.s32 0, %v327
    %v329 = vrot.slane %v185, %v328
    %330 = vset.pattern.permute.xlu0 0
    %331 = vperm.xlu0 %330, %v317
    %v332 = vpop.permute.xlu0 %331
    %334 = vset.pattern.permute.xlu0 0
    %335 = vperm.xlu0 %334, %v321
    %v336 = vpop.permute.xlu0 %335
    %338 = vset.pattern.permute.xlu0 0
    %339 = vperm.xlu0 %338, %v325
    %v340 = vpop.permute.xlu0 %339
    %342 = vset.pattern.permute.xlu0 0
    %343 = vperm.xlu0 %342, %v329
    %v344 = vpop.permute.xlu0 %343
    %v346 = vadd.f32 %v303, %v332
    %v347 = vadd.f32 %v305, %v336
    %v348 = vadd.f32 %v307, %v340
    %v349 = vadd.f32 %v309, %v344
    %v350 = vmul.f32 %v303, %v332
    %v351 = vmul.f32 %v305, %v336
    %v352 = vmul.f32 %v307, %v340
    %v353 = vmul.f32 %v309, %v344
    %v354 = vadd.f32 %v350, 1.0
    %v355 = vadd.f32 %v351, 1.0
    %v356 = vadd.f32 %v352, 1.0
    %v357 = vadd.f32 %v353, 1.0
    %v358 = vsel %vm286, %v346, %v354
    %v359 = vsel %vm287, %v347, %v355
    %v360 = vsel %vm288, %v348, %v356
    %v361 = vsel %vm289, %v349, %v357
    %v366 = vlaneseq
    %v367 = vshrl.u32 %v366, 7
    %v368 = vsub.s32 0, %v367
    %v369 = vrot.slane %v198, %v368
    %v370 = vlaneseq
    %v371 = vshrl.u32 %v370, 7
    %v372 = vsub.s32 0, %v371
    %v373 = vrot.slane %v199, %v372
    %v374 = vlaneseq
    %v375 = vshrl.u32 %v374, 7
    %v376 = vsub.s32 0, %v375
    %v377 = vrot.slane %v200, %v376
    %v378 = vlaneseq
    %v379 = vshrl.u32 %v378, 7
    %v380 = vsub.s32 0, %v379
    %v381 = vrot.slane %v201, %v380
    %382 = vset.pattern.permute.xlu0 0
    %383 = vperm.xlu0 %382, %v369
    %v384 = vpop.permute.xlu0 %383
    %386 = vset.pattern.permute.xlu0 0
    %387 = vperm.xlu0 %386, %v373
    %v388 = vpop.permute.xlu0 %387
    %390 = vset.pattern.permute.xlu0 0
    %391 = vperm.xlu0 %390, %v377
    %v392 = vpop.permute.xlu0 %391
    %394 = vset.pattern.permute.xlu0 0
    %395 = vperm.xlu0 %394, %v381
    %v396 = vpop.permute.xlu0 %395
    %v398 = vadd.f32 %v294, %v384
    %v399 = vadd.f32 %v295, %v388
    %v400 = vadd.f32 %v296, %v392
    %v401 = vadd.f32 %v297, %v396
    %v402 = vadd.f32 %v303, 1.0
    %v403 = vadd.f32 %v305, 1.0
    %v404 = vadd.f32 %v307, 1.0
    %v405 = vadd.f32 %v309, 1.0
    %v406 = vmul.f32 %v402, %v358
    %v407 = vmul.f32 %v403, %v359
    %v408 = vmul.f32 %v404, %v360
    %v409 = vmul.f32 %v405, %v361
    %v410 = vlog2.pop %v406
    %v411 = vmul.f32 %v410, 0.6931472
    %v412 = vlog2.pop %v407
    %v413 = vmul.f32 %v412, 0.6931472
    %v414 = vlog2.pop %v408
    %v415 = vmul.f32 %v414, 0.6931472
    %v416 = vlog2.pop %v409
    %v417 = vmul.f32 %v416, 0.6931472
    %v418 = vadd.f32 %v398, %v411
    %v419 = vadd.f32 %v399, %v413
    %v420 = vadd.f32 %v400, %v415
    %v421 = vadd.f32 %v401, %v417
    %v422 = vsel %vm62, %v418, 0.0
    %v423 = vsel %vm62, %v419, 0.0
    %v424 = vadd.f32 %v422, %v423
    %v425 = vsel %vm62, %v420, 0.0
    %v426 = vadd.f32 %v424, %v425
    %v427 = vsel %vm62, %v421, 0.0
    %v428 = vadd.f32 %v426, %v427
    %429 = vadd.xlane.f32.xlu0 %v428
    %v430 = vpop.xlane.xlu0 %429
    %v431 = vrot.slane %v430, 4
    %v432 = vadd.f32 %v430, %v431
    %v433 = vrot.slane %v432, 2
    %v434 = vadd.f32 %v432, %v433
    %v435 = vrot.slane %v434, 1
    %v436 = vadd.f32 %v434, %v435
    %s437 = vtos %v436
    %s438 = smul.f32 %s437, 1.442695
    %s439 = scalar_lea.smem [#allocation2], 0
    %440 = sst [smem:[%s439]] %s438
    // Predicated region
    $region14: #{_forward_impl.5} parent=1 // pred_check
      _
    $region15: #{_forward_impl.5} parent=1 // pred_check_branch
      %442 = sbr.rel (0) target = $region17
    $region16: #{_forward_impl.5} parent=1 // pred_region
      _
    $region17: #{_forward_impl.5} parent=1 // pred_fallthru
      _
    // Predicated region
    $region18: #{_forward_impl.5} parent=1 // pred_check
      _
    $region19: #{_forward_impl.5} parent=1 // pred_check_branch
      %444 = sbr.rel (0) target = $region21
    $region20: #{_forward_impl.5} parent=1 // pred_region
      _
    $region21: #{_forward_impl.5} parent=1 // pred_fallthru
      _
    // Predicated region
    $region22: #{_forward_impl.5} parent=1 // pred_check
      _
    $region23: #{_forward_impl.5} parent=1 // pred_check_branch
      %446 = sbr.rel (0) target = $region25
    $region24: #{_forward_impl.5} parent=1 // pred_region
      %s448 = ssub.s32 16, 16
      %449 = vsyncadd [#allocation3], %s448
      %452 = dma.smem_to_hbm [#allocation2], 16, %s5, [#allocation3]
    $region25: #{_forward_impl.5} parent=1 // pred_fallthru
      _
    // Predicated region
    $region26: #{_forward_impl.5} parent=1 // pred_check
      _
    $region27: #{_forward_impl.5} parent=1 // pred_check_branch
      %454 = sbr.rel (0) target = $region29
    $region28: #{_forward_impl.5} parent=1 // pred_region
      _
    $region29: #{_forward_impl.5} parent=1 // pred_fallthru
      _
    // Predicated region
    $region30: #{_forward_impl.5} parent=1 // pred_check
      _
    $region31: #{_forward_impl.5} parent=1 // pred_check_branch
      %456 = sbr.rel (0) target = $region33
    $region32: #{_forward_impl.5} parent=1 // pred_region
      _
    $region33: #{_forward_impl.5} parent=1 // pred_fallthru
      _
    // Predicated region
    $region34: #{_forward_impl.5} parent=1 // pred_check
      _
    $region35: #{_forward_impl.5} parent=1 // pred_check_branch
      %458 = sbr.rel (0) target = $region37
    $region36: #{_forward_impl.5} parent=1 // pred_region
      %459 = dma.done [#allocation3], 16
    $region37: #{_forward_impl.5} parent=1 // pred_fallthru
      _
    %460 = sfence
    %461 = vsyncpa [#allocation3], 1

// kernel: _forward_impl.6
$region0: #{_forward_impl.6}
  #allocation0 [shape = 'u32[]', space=smem, size = 0x4, offset = 0x4, fixed_abs, tag = 'smem constant byte address 0x4 - core index']
  #allocation1 [shape = 'u32[144,128]{1,0:T(1,128)}', space=vmem, size = 0x12000, scoped, tag = 'internal scratch']
  %s0 = inlined_call_operand.vmem [shape: f32[4,32], index: 0, kind: input, shape index: {}]
  %s1 = inlined_call_operand.vmem [shape: bf16[32,32], index: 1, kind: input, shape index: {}]
  %s2 = inlined_call_operand.vmem [shape: f32[16,32], index: 2, kind: input, shape index: {}]
  %s3 = inlined_call_operand.vmem [shape: bf16[32,4], index: 3, kind: input, shape index: {}]
  %s4 = inlined_call_operand.vmem [shape: bf16[32,32], index: 4, kind: input, shape index: {}]
  %s5 = inlined_call_operand.vmem [shape: f32[32,1], index: 5, kind: input, shape index: {}]
  %s6 = inlined_call_operand.vmem [shape: bf16[8,32], index: 6, kind: input, shape index: {}]
  %s7 = inlined_call_operand.vmem [shape: f32[8,1], index: 7, kind: input, shape index: {}]
  %s8 = inlined_call_operand.vmem [shape: bf16[32,32], index: 8, kind: output, shape index: {0}]
  %s9 = inlined_call_operand.hbm [shape: f32[1,1], index: 9, kind: output, shape index: {1}]
  %10 = xla_tuple %s8, %s9
  %s11 = sld [smem:[#allocation0]]
  $region50: #{_forward_impl.6} parent=0
    _
  %s13 = ssub.s32 1, %s11
  %s14 = scalar_select 0, %s13, %s11
  $region1: #{_forward_impl.6} parent=0
    #allocation2 [shape = 'u8[512]{0}', space=smem, size = 0x200, scoped, tag = 'output window, operand 1, single buffered']
    #allocation3 [shape = 's32[1]{0}', space=sflag, size = 0x4, scoped, tag = 'scoped memory for _forward_impl.6']
    %15 = vsyncpa [#allocation3], 0
    // Predicated region
    $region2: #{_forward_impl.6} parent=1 // pred_check
      _
    $region3: #{_forward_impl.6} parent=1 // pred_check_branch
      %17 = sbr.rel (0) target = $region5
    $region4: #{_forward_impl.6} parent=1 // pred_region
      _
    $region5: #{_forward_impl.6} parent=1 // pred_fallthru
      _
    // Predicated region
    $region6: #{_forward_impl.6} parent=1 // pred_check
      _
    $region7: #{_forward_impl.6} parent=1 // pred_check_branch
      %19 = sbr.rel (0) target = $region9
    $region8: #{_forward_impl.6} parent=1 // pred_region
      _
    $region9: #{_forward_impl.6} parent=1 // pred_fallthru
      _
    // Predicated region
    $region10: #{_forward_impl.6} parent=1 // pred_check
      _
    $region11: #{_forward_impl.6} parent=1 // pred_check_branch
      %21 = sbr.rel (0) target = $region13
    $region12: #{_forward_impl.6} parent=1 // pred_region
      _
    $region13: #{_forward_impl.6} parent=1 // pred_fallthru
      _
    // Predicated region
    $region14: #{_forward_impl.6} parent=1 // pred_check
      _
    $region15: #{_forward_impl.6} parent=1 // pred_check_branch
      %23 = sbr.rel (0) target = $region17
    $region16: #{_forward_impl.6} parent=1 // pred_region
      _
    $region17: #{_forward_impl.6} parent=1 // pred_fallthru
      _
    // Predicated region
    $region18: #{_forward_impl.6} parent=1 // pred_check
      _
    $region19: #{_forward_impl.6} parent=1 // pred_check_branch
      %25 = sbr.rel (0) target = $region21
    $region20: #{_forward_impl.6} parent=1 // pred_region
      _
    $region21: #{_forward_impl.6} parent=1 // pred_fallthru
      _
    // Predicated region
    $region22: #{_forward_impl.6} parent=1 // pred_check
      _
    $region23: #{_forward_impl.6} parent=1 // pred_check_branch
      %27 = sbr.rel (0) target = $region25
    $region24: #{_forward_impl.6} parent=1 // pred_region
      _
    $region25: #{_forward_impl.6} parent=1 // pred_fallthru
      _
    // Predicated region
    $region26: #{_forward_impl.6} parent=1 // pred_check
      _
    $region27: #{_forward_impl.6} parent=1 // pred_check_branch
      %29 = sbr.rel (0) target = $region29
    $region28: #{_forward_impl.6} parent=1 // pred_region
      _
    $region29: #{_forward_impl.6} parent=1 // pred_fallthru
      _
    // Predicated region
    $region30: #{_forward_impl.6} parent=1 // pred_check
      _
    $region31: #{_forward_impl.6} parent=1 // pred_check_branch
      %31 = sbr.rel (0) target = $region33
    $region32: #{_forward_impl.6} parent=1 // pred_region
      _
    $region33: #{_forward_impl.6} parent=1 // pred_fallthru
      _
    %v33 = vld [vmem:[%s0] sm:$0xf]
    %v34 = vld [vmem:[%s3] sm:$0xf]
    %v35 = vld [vmem:[%s3 + $0x4] sm:$0xf]
    %v36 = vld [vmem:[%s3 + $0x8] sm:$0xf]
    %v37 = vld [vmem:[%s3 + $0xc] sm:$0xf]
    %v38 = vpack.c.bf16 %v33, %v33
    %v39 = vld [vmem:[%s4] sm:$0xf]
    %v40 = vld [vmem:[%s4 + $0x4] sm:$0xf]
    %v41 = vld [vmem:[%s4 + $0x8] sm:$0xf]
    %v42 = vld [vmem:[%s4 + $0xc] sm:$0xf]
    %v43 = vld [vmem:[%s1] sm:$0xf]
    %v44 = vld [vmem:[%s1 + $0x4] sm:$0xf]
    %v45 = vld [vmem:[%s1 + $0x8] sm:$0xf]
    %v46 = vld [vmem:[%s1 + $0xc] sm:$0xf]
    %v51 = vunpack.c.l.b16 %v39
    %v52 = vunpack.c.l.b16 %v40
    %v53 = vunpack.c.l.b16 %v41
    %v54 = vunpack.c.l.b16 %v42
    %v55 = vpack.c.b16 %v52, %v51
    %v56 = vpack.c.b16 %v54, %v53
    %v61 = vunpack.c.l.b16 %v43
    %v62 = vunpack.c.l.b16 %v44
    %v63 = vunpack.c.l.b16 %v45
    %v64 = vunpack.c.l.b16 %v46
    %v65 = vpack.c.b16 %v62, %v61
    %v66 = vpack.c.b16 %v64, %v63
    %vm69 = vcmask 261120
    %v71 = vsel %vm69, %v55, 0
    %v74 = vsel %vm69, %v56, 0
    %76 = vmatprep.subr.bf16.mxu0 0
    %77 = vmatpush1.bf16.msra.mxu0 %v65
    %78 = vmatprep.subr.bf16.mxu0 0
    %79 = vmatpush1.bf16.msra.mxu0 %v66
    %80 = vmatprep.subr.bf16.mxu0 0
    %81 = vmatpush1.bf16.msra.mxu0 0
    %82 = vmatprep.subr.bf16.mxu0 0
    %83 = vmatpush1.bf16.msra.mxu0 0
    %84 = vmatprep.subr.bf16.mxu0 0
    %85 = vmatpush1.bf16.msra.mxu0 0
    %86 = vmatprep.subr.bf16.mxu0 0
    %87 = vmatpush1.bf16.msra.mxu0 0
    %88 = vmatprep.subr.bf16.mxu0 0
    %89 = vmatpush1.bf16.msra.mxu0 0
    %90 = vmatprep.subr.bf16.mxu0 0
    %91 = vmatpush1.bf16.msra.mxu0 0
    %92 = vmatprep.subr.bf16.mxu0 0
    %93 = vmatpush1.bf16.msra.mxu0 0
    %94 = vmatprep.subr.bf16.mxu0 0
    %95 = vmatpush1.bf16.msra.mxu0 0
    %96 = vmatprep.subr.bf16.mxu0 0
    %97 = vmatpush1.bf16.msra.mxu0 0
    %98 = vmatprep.subr.bf16.mxu0 0
    %99 = vmatpush1.bf16.msra.mxu0 0
    %100 = vmatprep.subr.bf16.mxu0 0
    %101 = vmatpush1.bf16.msra.mxu0 0
    %102 = vmatprep.subr.bf16.mxu0 0
    %103 = vmatpush1.bf16.msra.mxu0 0
    %104 = vmatprep.subr.bf16.mxu0 0
    %105 = vmatpush1.bf16.msra.mxu0 0
    %106 = vmatprep.subr.bf16.mxu0 0
    %107 = vmatpush1.bf16.msra.mxu0 0
    %108 = vmatprep.mubr.bf16.mxu0 0
    %109 = vmatmul.mubr.bf16.gmra.mrb[0].mxu0 %v71
    %v110 = vpop.f32.mrb[0].mxu0
    %v111 = vadd.f32 0.0, %v110
    %v112 = vpop.f32.mrb[0].mxu0
    %v113 = vpop.f32.mrb[0].mxu0
    %v114 = vadd.f32 0.0, %v113
    %v115 = vpop.f32.mrb[0].mxu0
    %116 = vmatprep.mubr.bf16.mxu0 0
    %117 = vmatmul.mubr.bf16.gmra.mrb[0].mxu0 %v74
    %v118 = vpop.f32.mrb[0].mxu0
    %v119 = vadd.f32 0.0, %v118
    %v120 = vpop.f32.mrb[0].mxu0
    %v121 = vpop.f32.mrb[0].mxu0
    %v122 = vadd.f32 0.0, %v121
    %v123 = vpop.f32.mrb[0].mxu0
    %124 = vdwg.mxu0
    %v129 = vunpack.c.l.b16 %v34
    %v130 = vunpack.c.l.b16 %v35
    %v131 = vunpack.c.l.b16 %v36
    %v132 = vunpack.c.l.b16 %v37
    %v133 = vpack.c.b16 %v130, %v129
    %v134 = vpack.c.b16 %v132, %v131
    %vm135 = vcmask 31744
    %v137 = vsel %vm135, %v133, 0
    %v140 = vsel %vm135, %v134, 0
    %vm142 = vcmask 1041408
    %v144 = vsel %vm142, %v38, 0
    %146 = vmatprep.subr.bf16.mxu0 0
    %147 = vmatpush1.bf16.msra.mxu0 %v144
    %148 = vmatprep.subr.bf16.mxu0 0
    %149 = vmatpush1.bf16.msra.mxu0 0
    %150 = vmatprep.subr.bf16.mxu0 0
    %151 = vmatpush1.bf16.msra.mxu0 0
    %152 = vmatprep.subr.bf16.mxu0 0
    %153 = vmatpush1.bf16.msra.mxu0 0
    %154 = vmatprep.subr.bf16.mxu0 0
    %155 = vmatpush1.bf16.msra.mxu0 0
    %156 = vmatprep.subr.bf16.mxu0 0
    %157 = vmatpush1.bf16.msra.mxu0 0
    %158 = vmatprep.subr.bf16.mxu0 0
    %159 = vmatpush1.bf16.msra.mxu0 0
    %160 = vmatprep.subr.bf16.mxu0 0
    %161 = vmatpush1.bf16.msra.mxu0 0
    %162 = vmatprep.subr.bf16.mxu0 0
    %163 = vmatpush1.bf16.msra.mxu0 0
    %164 = vmatprep.subr.bf16.mxu0 0
    %165 = vmatpush1.bf16.msra.mxu0 0
    %166 = vmatprep.subr.bf16.mxu0 0
    %167 = vmatpush1.bf16.msra.mxu0 0
    %168 = vmatprep.subr.bf16.mxu0 0
    %169 = vmatpush1.bf16.msra.mxu0 0
    %170 = vmatprep.subr.bf16.mxu0 0
    %171 = vmatpush1.bf16.msra.mxu0 0
    %172 = vmatprep.subr.bf16.mxu0 0
    %173 = vmatpush1.bf16.msra.mxu0 0
    %174 = vmatprep.subr.bf16.mxu0 0
    %175 = vmatpush1.bf16.msra.mxu0 0
    %176 = vmatprep.subr.bf16.mxu0 0
    %177 = vmatpush1.bf16.msra.mxu0 0
    %178 = vmatprep.mubr.bf16.mxu0 0
    %179 = vmatmul.mubr.bf16.gmra.mrb[0].mxu0 %v137
    %v180 = vpop.f32.mrb[0].mxu0
    %v181 = vadd.f32 %v111, %v180
    %v182 = vpop.f32.mrb[0].mxu0
    %v183 = vpop.f32.mrb[0].mxu0
    %v184 = vadd.f32 %v114, %v183
    %v185 = vpop.f32.mrb[0].mxu0
    %186 = vmatprep.mubr.bf16.mxu0 0
    %187 = vmatmul.mubr.bf16.gmra.mrb[0].mxu0 %v140
    %v188 = vpop.f32.mrb[0].mxu0
    %v189 = vadd.f32 %v119, %v188
    %v190 = vpop.f32.mrb[0].mxu0
    %v191 = vpop.f32.mrb[0].mxu0
    %v192 = vadd.f32 %v122, %v191
    %v193 = vpop.f32.mrb[0].mxu0
    %194 = vdwg.mxu0
    %v195 = vld [vmem:[%s5] sm:$0xff]
    %v196 = vld [vmem:[%s5 + $0x8] sm:$0xff]
    %v197 = vld [vmem:[%s5 + $0x10] sm:$0xff]
    %v198 = vld [vmem:[%s5 + $0x18] sm:$0xff]
    %200 = vset.pattern.permute.xlu0 0
    %201 = vperm.xlu0 %200, %v195
    %v202 = vpop.permute.xlu0 %201
    %205 = vset.pattern.permute.xlu0 0
    %206 = vperm.xlu0 %205, %v196
    %v207 = vpop.permute.xlu0 %206
    %210 = vset.pattern.permute.xlu0 0
    %211 = vperm.xlu0 %210, %v197
    %v212 = vpop.permute.xlu0 %211
    %215 = vset.pattern.permute.xlu0 0
    %216 = vperm.xlu0 %215, %v198
    %v217 = vpop.permute.xlu0 %216
    %v219 = vadd.f32 %v181, %v202
    %v220 = vadd.f32 %v184, %v207
    %v221 = vadd.f32 %v189, %v212
    %v222 = vadd.f32 %v192, %v217
    %v223 = vmax.f32 %v219, 0.0
    %v224 = vmax.f32 %v220, 0.0
    %v225 = vmax.f32 %v221, 0.0
    %v226 = vmax.f32 %v222, 0.0
    %v227 = vpack.c.bf16 %v224, %v223
    %v228 = vpack.c.bf16 %v226, %v225
    %v231 = vunpack.c.l.b16 %v227
    %v232 = vunpack.c.h.b16 %v227
    %v233 = vunpack.c.l.b16 %v228
    %v234 = vunpack.c.h.b16 %v228
    %v235 = vpack.c.b16 %v231, %v231
    %v236 = vpack.c.b16 %v232, %v232
    %v237 = vpack.c.b16 %v233, %v233
    %v238 = vpack.c.b16 %v234, %v234
    %vm243 = vcmask 257024
    %244 = vst.msk [vmem:[%s8] sm:$0xf] %vm243, %v235
    %245 = vst.msk [vmem:[%s8 + $0x4] sm:$0xf] %vm243, %v236
    %246 = vst.msk [vmem:[%s8 + $0x8] sm:$0xf] %vm243, %v237
    %247 = vst.msk [vmem:[%s8 + $0xc] sm:$0xf] %vm243, %v238
    %v248 = vld [vmem:[%s6] sm:$0xf]
    %v249 = vld [vmem:[%s7] sm:$0xff]
    %251 = vset.pattern.permute.xlu0 0
    %252 = vperm.xlu0 %251, %v249
    %v253 = vpop.permute.xlu0 %252
    %v256 = vsel %vm69, %v248, 0
    %258 = vmatprep.subr.bf16.mxu0 0
    %259 = vmatpush1.bf16.msra.mxu0 %v227
    %260 = vmatprep.subr.bf16.mxu0 0
    %261 = vmatpush1.bf16.msra.mxu0 %v228
    %262 = vmatprep.subr.bf16.mxu0 0
    %263 = vmatpush1.bf16.msra.mxu0 0
    %264 = vmatprep.subr.bf16.mxu0 0
    %265 = vmatpush1.bf16.msra.mxu0 0
    %266 = vmatprep.subr.bf16.mxu0 0
    %267 = vmatpush1.bf16.msra.mxu0 0
    %268 = vmatprep.subr.bf16.mxu0 0
    %269 = vmatpush1.bf16.msra.mxu0 0
    %270 = vmatprep.subr.bf16.mxu0 0
    %271 = vmatpush1.bf16.msra.mxu0 0
    %272 = vmatprep.subr.bf16.mxu0 0
    %273 = vmatpush1.bf16.msra.mxu0 0
    %274 = vmatprep.subr.bf16.mxu0 0
    %275 = vmatpush1.bf16.msra.mxu0 0
    %276 = vmatprep.subr.bf16.mxu0 0
    %277 = vmatpush1.bf16.msra.mxu0 0
    %278 = vmatprep.subr.bf16.mxu0 0
    %279 = vmatpush1.bf16.msra.mxu0 0
    %280 = vmatprep.subr.bf16.mxu0 0
    %281 = vmatpush1.bf16.msra.mxu0 0
    %282 = vmatprep.subr.bf16.mxu0 0
    %283 = vmatpush1.bf16.msra.mxu0 0
    %284 = vmatprep.subr.bf16.mxu0 0
    %285 = vmatpush1.bf16.msra.mxu0 0
    %286 = vmatprep.subr.bf16.mxu0 0
    %287 = vmatpush1.bf16.msra.mxu0 0
    %288 = vmatprep.subr.bf16.mxu0 0
    %289 = vmatpush1.bf16.msra.mxu0 0
    %290 = vmatprep.mubr.bf16.mxu0 0
    %291 = vmatmul.mubr.bf16.gmra.mrb[0].mxu0 %v256
    %v292 = vpop.f32.mrb[0].mxu0
    %v293 = vadd.f32 %v253, %v292
    %v294 = vpop.f32.mrb[0].mxu0
    %v295 = vpop.f32.mrb[0].mxu0
    %v296 = vpop.f32.mrb[0].mxu0
    %297 = vdwg.mxu0
    %v298 = vadd.f32 %v293, %v33
    %v299 = vmax.f32 %v293, -8.0
    %v300 = vmin.f32 %v299, 8.0
    %v301 = vsub.f32 0.0, %v300
    %v302 = vmul.f32 %v301, 1.442695
    %v303 = vpow.pop %v302
    %v304 = vsub.f32 0.0, %v303
    %v305 = vmul.f32 %v304, 1.442695
    %v306 = vpow.pop %v305
    %v307 = vsub.f32 1.0, %v306
    %v308 = vlog2.pop %v307
    %v309 = vmul.f32 %v308, 0.6931472
    %v310 = vsub.f32 0.0, %v309
    %v312 = vrot.slane %v298, 4
    %vm314 = vcmask 1043456
    %v315 = vsel %vm314, %v298, %v312
    %v317 = vrot.slane %v303, 4
    %v319 = vsel %vm314, %v317, %v303
    %v321 = vrot.slane %v306, 4
    %v323 = vsel %vm314, %v321, %v306
    %v325 = vrot.slane %v310, 4
    %v327 = vsel %vm314, %v325, %v310
    %v328 = vld [vmem:[%s2] sm:$0xff]
    %v329 = vld [vmem:[%s2 + $0x8] sm:$0xff]
    %v330 = vsub.f32 %v328, %v315
    %v331 = vsub.f32 %v329, %v315
    %v332 = vand.u32 2147483647, %v330
    %v333 = vand.u32 2147483647, %v331
    %v334 = vsub.f32 %v332, 0.5
    %v335 = vsub.f32 %v333, 0.5
    %v336 = vmul.f32 %v334, %v319
    %v337 = vmul.f32 %v335, %v319
    %v338 = vand.u32 2147483647, %v336
    %v339 = vand.u32 2147483647, %v337
    %vm340 = vcmp.lt.f32.partialorder %v336, 0.0
    %vm341 = vcmp.lt.f32.partialorder %v337, 0.0
    %v342 = vmin.f32 %v338, 80.0
    %v343 = vmin.f32 %v339, 80.0
    %v344 = vsel %vm340, %v342, %v338
    %v345 = vsel %vm341, %v343, %v339
    %v346 = vsub.f32 0.0, %v344
    %v347 = vsub.f32 0.0, %v345
    %v348 = vmul.f32 %v346, 1.442695
    %v349 = vpow.pop %v348
    %v350 = vmul.f32 %v347, 1.442695
    %v351 = vpow.pop %v350
    %v352 = vadd.f32 %v349, %v323
    %v353 = vadd.f32 %v351, %v323
    %v354 = vmul.f32 %v349, %v323
    %v355 = vmul.f32 %v351, %v323
    %v356 = vadd.f32 %v354, 1.0
    %v357 = vadd.f32 %v355, 1.0
    %v358 = vsel %vm340, %v352, %v356
    %v359 = vsel %vm341, %v353, %v357
    %v360 = vadd.f32 %v344, %v327
    %v361 = vadd.f32 %v345, %v327
    %v362 = vadd.f32 %v349, 1.0
    %v363 = vadd.f32 %v351, 1.0
    %v364 = vmul.f32 %v362, %v358
    %v365 = vmul.f32 %v363, %v359
    %v366 = vlog2.pop %v364
    %v367 = vmul.f32 %v366, 0.6931472
    %v368 = vlog2.pop %v365
    %v369 = vmul.f32 %v368, 0.6931472
    %v370 = vadd.f32 %v360, %v367
    %v371 = vadd.f32 %v361, %v369
    %v372 = vsel %vm69, %v370, 0.0
    %v373 = vsel %vm69, %v371, 0.0
    %v374 = vadd.f32 %v372, %v373
    %375 = vadd.xlane.f32.xlu0 %v374
    %v376 = vpop.xlane.xlu0 %375
    %v377 = vrot.slane %v376, 4
    %v378 = vadd.f32 %v376, %v377
    %v379 = vrot.slane %v378, 2
    %v380 = vadd.f32 %v378, %v379
    %v381 = vrot.slane %v380, 1
    %v382 = vadd.f32 %v380, %v381
    %s383 = vtos %v382
    %s384 = smul.f32 %s383, 1.442695
    %s385 = scalar_lea.smem [#allocation2], 0
    %386 = sst [smem:[%s385]] %s384
    // Predicated region
    $region34: #{_forward_impl.6} parent=1 // pred_check
      _
    $region35: #{_forward_impl.6} parent=1 // pred_check_branch
      %388 = sbr.rel (0) target = $region37
    $region36: #{_forward_impl.6} parent=1 // pred_region
      _
    $region37: #{_forward_impl.6} parent=1 // pred_fallthru
      _
    // Predicated region
    $region38: #{_forward_impl.6} parent=1 // pred_check
      _
    $region39: #{_forward_impl.6} parent=1 // pred_check_branch
      %390 = sbr.rel (0) target = $region41
    $region40: #{_forward_impl.6} parent=1 // pred_region
      %s392 = ssub.s32 16, 16
      %393 = vsyncadd [#allocation3], %s392
      %396 = dma.smem_to_hbm [#allocation2], 16, %s9, [#allocation3]
    $region41: #{_forward_impl.6} parent=1 // pred_fallthru
      _
    // Predicated region
    $region42: #{_forward_impl.6} parent=1 // pred_check
      _
    $region43: #{_forward_impl.6} parent=1 // pred_check_branch
      %398 = sbr.rel (0) target = $region45
    $region44: #{_forward_impl.6} parent=1 // pred_region
      _
    $region45: #{_forward_impl.6} parent=1 // pred_fallthru
      _
    // Predicated region
    $region46: #{_forward_impl.6} parent=1 // pred_check
      _
    $region47: #{_forward_impl.6} parent=1 // pred_check_branch
      %400 = sbr.rel (0) target = $region49
    $region48: #{_forward_impl.6} parent=1 // pred_region
      %401 = dma.done [#allocation3], 16
    $region49: #{_forward_impl.6} parent=1 // pred_fallthru
      _
    %402 = sfence
    %403 = vsyncpa [#allocation3], 1

// kernel: _forward_impl.7
$region0: #{_forward_impl.7}
  #allocation0 [shape = 'u32[]', space=smem, size = 0x4, offset = 0x4, fixed_abs, tag = 'smem constant byte address 0x4 - core index']
  #allocation1 [shape = 'u32[144,128]{1,0:T(1,128)}', space=vmem, size = 0x12000, scoped, tag = 'internal scratch']
  %s0 = inlined_call_operand.vmem [shape: f32[4,128], index: 0, kind: input, shape index: {}]
  %s1 = inlined_call_operand.vmem [shape: bf16[32,128], index: 1, kind: input, shape index: {}]
  %s2 = inlined_call_operand.vmem [shape: f32[16,128], index: 2, kind: input, shape index: {}]
  %s3 = inlined_call_operand.vmem [shape: bf16[32,4], index: 3, kind: input, shape index: {}]
  %s4 = inlined_call_operand.vmem [shape: bf16[32,32], index: 4, kind: input, shape index: {}]
  %s5 = inlined_call_operand.vmem [shape: f32[32,1], index: 5, kind: input, shape index: {}]
  %s6 = inlined_call_operand.vmem [shape: bf16[8,32], index: 6, kind: input, shape index: {}]
  %s7 = inlined_call_operand.vmem [shape: f32[8,1], index: 7, kind: input, shape index: {}]
  %s8 = inlined_call_operand.hbm [shape: f32[1,1], index: 8, kind: output, shape index: {}]
  %s9 = sld [smem:[#allocation0]]
  $region42: #{_forward_impl.7} parent=0
    _
  %s11 = ssub.s32 1, %s9
  %s12 = scalar_select 0, %s11, %s9
  $region1: #{_forward_impl.7} parent=0
    #allocation2 [shape = 'u8[512]{0}', space=smem, size = 0x200, scoped, tag = 'output window, operand 0, single buffered']
    #allocation3 [shape = 's32[1]{0}', space=sflag, size = 0x4, scoped, tag = 'scoped memory for _forward_impl.7']
    %13 = vsyncpa [#allocation3], 0
    // Predicated region
    $region2: #{_forward_impl.7} parent=1 // pred_check
      _
    $region3: #{_forward_impl.7} parent=1 // pred_check_branch
      %15 = sbr.rel (0) target = $region5
    $region4: #{_forward_impl.7} parent=1 // pred_region
      _
    $region5: #{_forward_impl.7} parent=1 // pred_fallthru
      _
    // Predicated region
    $region6: #{_forward_impl.7} parent=1 // pred_check
      _
    $region7: #{_forward_impl.7} parent=1 // pred_check_branch
      %17 = sbr.rel (0) target = $region9
    $region8: #{_forward_impl.7} parent=1 // pred_region
      _
    $region9: #{_forward_impl.7} parent=1 // pred_fallthru
      _
    // Predicated region
    $region10: #{_forward_impl.7} parent=1 // pred_check
      _
    $region11: #{_forward_impl.7} parent=1 // pred_check_branch
      %19 = sbr.rel (0) target = $region13
    $region12: #{_forward_impl.7} parent=1 // pred_region
      _
    $region13: #{_forward_impl.7} parent=1 // pred_fallthru
      _
    // Predicated region
    $region14: #{_forward_impl.7} parent=1 // pred_check
      _
    $region15: #{_forward_impl.7} parent=1 // pred_check_branch
      %21 = sbr.rel (0) target = $region17
    $region16: #{_forward_impl.7} parent=1 // pred_region
      _
    $region17: #{_forward_impl.7} parent=1 // pred_fallthru
      _
    // Predicated region
    $region18: #{_forward_impl.7} parent=1 // pred_check
      _
    $region19: #{_forward_impl.7} parent=1 // pred_check_branch
      %23 = sbr.rel (0) target = $region21
    $region20: #{_forward_impl.7} parent=1 // pred_region
      _
    $region21: #{_forward_impl.7} parent=1 // pred_fallthru
      _
    // Predicated region
    $region22: #{_forward_impl.7} parent=1 // pred_check
      _
    $region23: #{_forward_impl.7} parent=1 // pred_check_branch
      %25 = sbr.rel (0) target = $region25
    $region24: #{_forward_impl.7} parent=1 // pred_region
      _
    $region25: #{_forward_impl.7} parent=1 // pred_fallthru
      _
    // Predicated region
    $region26: #{_forward_impl.7} parent=1 // pred_check
      _
    $region27: #{_forward_impl.7} parent=1 // pred_check_branch
      %27 = sbr.rel (0) target = $region29
    $region28: #{_forward_impl.7} parent=1 // pred_region
      _
    $region29: #{_forward_impl.7} parent=1 // pred_fallthru
      _
    // Predicated region
    $region30: #{_forward_impl.7} parent=1 // pred_check
      _
    $region31: #{_forward_impl.7} parent=1 // pred_check_branch
      %29 = sbr.rel (0) target = $region33
    $region32: #{_forward_impl.7} parent=1 // pred_region
      _
    $region33: #{_forward_impl.7} parent=1 // pred_fallthru
      _
    %v31 = vld [vmem:[%s0] sm:$0xf]
    %v32 = vld [vmem:[%s3] sm:$0xf]
    %v33 = vld [vmem:[%s3 + $0x4] sm:$0xf]
    %v34 = vld [vmem:[%s3 + $0x8] sm:$0xf]
    %v35 = vld [vmem:[%s3 + $0xc] sm:$0xf]
    %v36 = vpack.c.bf16 %v31, %v31
    %v37 = vld [vmem:[%s4] sm:$0xf]
    %v38 = vld [vmem:[%s4 + $0x4] sm:$0xf]
    %v39 = vld [vmem:[%s4 + $0x8] sm:$0xf]
    %v40 = vld [vmem:[%s4 + $0xc] sm:$0xf]
    %v41 = vld [vmem:[%s1] sm:$0xf]
    %v42 = vld [vmem:[%s1 + $0x4] sm:$0xf]
    %v43 = vld [vmem:[%s1 + $0x8] sm:$0xf]
    %v44 = vld [vmem:[%s1 + $0xc] sm:$0xf]
    %v49 = vunpack.c.l.b16 %v37
    %v50 = vunpack.c.l.b16 %v38
    %v51 = vunpack.c.l.b16 %v39
    %v52 = vunpack.c.l.b16 %v40
    %v53 = vpack.c.b16 %v50, %v49
    %v54 = vpack.c.b16 %v52, %v51
    %v59 = vunpack.c.l.b16 %v41
    %v60 = vunpack.c.l.b16 %v42
    %v61 = vunpack.c.l.b16 %v43
    %v62 = vunpack.c.l.b16 %v44
    %v63 = vpack.c.b16 %v60, %v59
    %v64 = vpack.c.b16 %v62, %v61
    %vm67 = vcmask 261120
    %v69 = vsel %vm67, %v53, 0
    %v72 = vsel %vm67, %v54, 0
    %74 = vmatprep.subr.bf16.mxu0 0
    %75 = vmatpush1.bf16.msra.mxu0 %v63
    %76 = vmatprep.subr.bf16.mxu0 0
    %77 = vmatpush1.bf16.msra.mxu0 %v64
    %78 = vmatprep.subr.bf16.mxu0 0
    %79 = vmatpush1.bf16.msra.mxu0 0
    %80 = vmatprep.subr.bf16.mxu0 0
    %81 = vmatpush1.bf16.msra.mxu0 0
    %82 = vmatprep.subr.bf16.mxu0 0
    %83 = vmatpush1.bf16.msra.mxu0 0
    %84 = vmatprep.subr.bf16.mxu0 0
    %85 = vmatpush1.bf16.msra.mxu0 0
    %86 = vmatprep.subr.bf16.mxu0 0
    %87 = vmatpush1.bf16.msra.mxu0 0
    %88 = vmatprep.subr.bf16.mxu0 0
    %89 = vmatpush1.bf16.msra.mxu0 0
    %90 = vmatprep.subr.bf16.mxu0 0
    %91 = vmatpush1.bf16.msra.mxu0 0
    %92 = vmatprep.subr.bf16.mxu0 0
    %93 = vmatpush1.bf16.msra.mxu0 0
    %94 = vmatprep.subr.bf16.mxu0 0
    %95 = vmatpush1.bf16.msra.mxu0 0
    %96 = vmatprep.subr.bf16.mxu0 0
    %97 = vmatpush1.bf16.msra.mxu0 0
    %98 = vmatprep.subr.bf16.mxu0 0
    %99 = vmatpush1.bf16.msra.mxu0 0
    %100 = vmatprep.subr.bf16.mxu0 0
    %101 = vmatpush1.bf16.msra.mxu0 0
    %102 = vmatprep.subr.bf16.mxu0 0
    %103 = vmatpush1.bf16.msra.mxu0 0
    %104 = vmatprep.subr.bf16.mxu0 0
    %105 = vmatpush1.bf16.msra.mxu0 0
    %106 = vmatprep.mubr.bf16.mxu0 0
    %107 = vmatmul.mubr.bf16.gmra.mrb[0].mxu0 %v69
    %v108 = vpop.f32.mrb[0].mxu0
    %v109 = vadd.f32 0.0, %v108
    %v110 = vpop.f32.mrb[0].mxu0
    %v111 = vpop.f32.mrb[0].mxu0
    %v112 = vadd.f32 0.0, %v111
    %v113 = vpop.f32.mrb[0].mxu0
    %114 = vmatprep.mubr.bf16.mxu0 0
    %115 = vmatmul.mubr.bf16.gmra.mrb[0].mxu0 %v72
    %v116 = vpop.f32.mrb[0].mxu0
    %v117 = vadd.f32 0.0, %v116
    %v118 = vpop.f32.mrb[0].mxu0
    %v119 = vpop.f32.mrb[0].mxu0
    %v120 = vadd.f32 0.0, %v119
    %v121 = vpop.f32.mrb[0].mxu0
    %122 = vdwg.mxu0
    %v127 = vunpack.c.l.b16 %v32
    %v128 = vunpack.c.l.b16 %v33
    %v129 = vunpack.c.l.b16 %v34
    %v130 = vunpack.c.l.b16 %v35
    %v131 = vpack.c.b16 %v128, %v127
    %v132 = vpack.c.b16 %v130, %v129
    %vm133 = vcmask 31744
    %v135 = vsel %vm133, %v131, 0
    %v138 = vsel %vm133, %v132, 0
    %vm140 = vcmask 1041408
    %v142 = vsel %vm140, %v36, 0
    %144 = vmatprep.subr.bf16.mxu0 0
    %145 = vmatpush1.bf16.msra.mxu0 %v142
    %146 = vmatprep.subr.bf16.mxu0 0
    %147 = vmatpush1.bf16.msra.mxu0 0
    %148 = vmatprep.subr.bf16.mxu0 0
    %149 = vmatpush1.bf16.msra.mxu0 0
    %150 = vmatprep.subr.bf16.mxu0 0
    %151 = vmatpush1.bf16.msra.mxu0 0
    %152 = vmatprep.subr.bf16.mxu0 0
    %153 = vmatpush1.bf16.msra.mxu0 0
    %154 = vmatprep.subr.bf16.mxu0 0
    %155 = vmatpush1.bf16.msra.mxu0 0
    %156 = vmatprep.subr.bf16.mxu0 0
    %157 = vmatpush1.bf16.msra.mxu0 0
    %158 = vmatprep.subr.bf16.mxu0 0
    %159 = vmatpush1.bf16.msra.mxu0 0
    %160 = vmatprep.subr.bf16.mxu0 0
    %161 = vmatpush1.bf16.msra.mxu0 0
    %162 = vmatprep.subr.bf16.mxu0 0
    %163 = vmatpush1.bf16.msra.mxu0 0
    %164 = vmatprep.subr.bf16.mxu0 0
    %165 = vmatpush1.bf16.msra.mxu0 0
    %166 = vmatprep.subr.bf16.mxu0 0
    %167 = vmatpush1.bf16.msra.mxu0 0
    %168 = vmatprep.subr.bf16.mxu0 0
    %169 = vmatpush1.bf16.msra.mxu0 0
    %170 = vmatprep.subr.bf16.mxu0 0
    %171 = vmatpush1.bf16.msra.mxu0 0
    %172 = vmatprep.subr.bf16.mxu0 0
    %173 = vmatpush1.bf16.msra.mxu0 0
    %174 = vmatprep.subr.bf16.mxu0 0
    %175 = vmatpush1.bf16.msra.mxu0 0
    %176 = vmatprep.mubr.bf16.mxu0 0
    %177 = vmatmul.mubr.bf16.gmra.mrb[0].mxu0 %v135
    %v178 = vpop.f32.mrb[0].mxu0
    %v179 = vadd.f32 %v109, %v178
    %v180 = vpop.f32.mrb[0].mxu0
    %v181 = vpop.f32.mrb[0].mxu0
    %v182 = vadd.f32 %v112, %v181
    %v183 = vpop.f32.mrb[0].mxu0
    %184 = vmatprep.mubr.bf16.mxu0 0
    %185 = vmatmul.mubr.bf16.gmra.mrb[0].mxu0 %v138
    %v186 = vpop.f32.mrb[0].mxu0
    %v187 = vadd.f32 %v117, %v186
    %v188 = vpop.f32.mrb[0].mxu0
    %v189 = vpop.f32.mrb[0].mxu0
    %v190 = vadd.f32 %v120, %v189
    %v191 = vpop.f32.mrb[0].mxu0
    %192 = vdwg.mxu0
    %v193 = vld [vmem:[%s5] sm:$0xff]
    %v194 = vld [vmem:[%s5 + $0x8] sm:$0xff]
    %v195 = vld [vmem:[%s5 + $0x10] sm:$0xff]
    %v196 = vld [vmem:[%s5 + $0x18] sm:$0xff]
    %198 = vset.pattern.permute.xlu0 0
    %199 = vperm.xlu0 %198, %v193
    %v200 = vpop.permute.xlu0 %199
    %203 = vset.pattern.permute.xlu0 0
    %204 = vperm.xlu0 %203, %v194
    %v205 = vpop.permute.xlu0 %204
    %208 = vset.pattern.permute.xlu0 0
    %209 = vperm.xlu0 %208, %v195
    %v210 = vpop.permute.xlu0 %209
    %213 = vset.pattern.permute.xlu0 0
    %214 = vperm.xlu0 %213, %v196
    %v215 = vpop.permute.xlu0 %214
    %v217 = vadd.f32 %v179, %v200
    %v218 = vadd.f32 %v182, %v205
    %v219 = vadd.f32 %v187, %v210
    %v220 = vadd.f32 %v190, %v215
    %v221 = vmax.f32 %v217, 0.0
    %v222 = vmax.f32 %v218, 0.0
    %v223 = vmax.f32 %v219, 0.0
    %v224 = vmax.f32 %v220, 0.0
    %v225 = vpack.c.bf16 %v222, %v221
    %v226 = vpack.c.bf16 %v224, %v223
    %v227 = vld [vmem:[%s6] sm:$0xf]
    %v228 = vld [vmem:[%s7] sm:$0xff]
    %230 = vset.pattern.permute.xlu0 0
    %231 = vperm.xlu0 %230, %v228
    %v232 = vpop.permute.xlu0 %231
    %v235 = vsel %vm67, %v227, 0
    %237 = vmatprep.subr.bf16.mxu0 0
    %238 = vmatpush1.bf16.msra.mxu0 %v225
    %239 = vmatprep.subr.bf16.mxu0 0
    %240 = vmatpush1.bf16.msra.mxu0 %v226
    %241 = vmatprep.subr.bf16.mxu0 0
    %242 = vmatpush1.bf16.msra.mxu0 0
    %243 = vmatprep.subr.bf16.mxu0 0
    %244 = vmatpush1.bf16.msra.mxu0 0
    %245 = vmatprep.subr.bf16.mxu0 0
    %246 = vmatpush1.bf16.msra.mxu0 0
    %247 = vmatprep.subr.bf16.mxu0 0
    %248 = vmatpush1.bf16.msra.mxu0 0
    %249 = vmatprep.subr.bf16.mxu0 0
    %250 = vmatpush1.bf16.msra.mxu0 0
    %251 = vmatprep.subr.bf16.mxu0 0
    %252 = vmatpush1.bf16.msra.mxu0 0
    %253 = vmatprep.subr.bf16.mxu0 0
    %254 = vmatpush1.bf16.msra.mxu0 0
    %255 = vmatprep.subr.bf16.mxu0 0
    %256 = vmatpush1.bf16.msra.mxu0 0
    %257 = vmatprep.subr.bf16.mxu0 0
    %258 = vmatpush1.bf16.msra.mxu0 0
    %259 = vmatprep.subr.bf16.mxu0 0
    %260 = vmatpush1.bf16.msra.mxu0 0
    %261 = vmatprep.subr.bf16.mxu0 0
    %262 = vmatpush1.bf16.msra.mxu0 0
    %263 = vmatprep.subr.bf16.mxu0 0
    %264 = vmatpush1.bf16.msra.mxu0 0
    %265 = vmatprep.subr.bf16.mxu0 0
    %266 = vmatpush1.bf16.msra.mxu0 0
    %267 = vmatprep.subr.bf16.mxu0 0
    %268 = vmatpush1.bf16.msra.mxu0 0
    %269 = vmatprep.mubr.bf16.mxu0 0
    %270 = vmatmul.mubr.bf16.gmra.mrb[0].mxu0 %v235
    %v271 = vpop.f32.mrb[0].mxu0
    %v272 = vadd.f32 %v232, %v271
    %v273 = vpop.f32.mrb[0].mxu0
    %v274 = vpop.f32.mrb[0].mxu0
    %v275 = vpop.f32.mrb[0].mxu0
    %276 = vdwg.mxu0
    %v277 = vadd.f32 %v272, %v31
    %v278 = vmax.f32 %v272, -8.0
    %v279 = vmin.f32 %v278, 8.0
    %v280 = vsub.f32 0.0, %v279
    %v281 = vmul.f32 %v280, 1.442695
    %v282 = vpow.pop %v281
    %v283 = vsub.f32 0.0, %v282
    %v284 = vmul.f32 %v283, 1.442695
    %v285 = vpow.pop %v284
    %v286 = vsub.f32 1.0, %v285
    %v287 = vlog2.pop %v286
    %v288 = vmul.f32 %v287, 0.6931472
    %v289 = vsub.f32 0.0, %v288
    %v291 = vrot.slane %v277, 4
    %vm293 = vcmask 1043456
    %v294 = vsel %vm293, %v277, %v291
    %v296 = vrot.slane %v282, 4
    %v298 = vsel %vm293, %v296, %v282
    %v300 = vrot.slane %v285, 4
    %v302 = vsel %vm293, %v300, %v285
    %v304 = vrot.slane %v289, 4
    %v306 = vsel %vm293, %v304, %v289
    %v307 = vld [vmem:[%s2] sm:$0xff]
    %v308 = vld [vmem:[%s2 + $0x8] sm:$0xff]
    %v309 = vsub.f32 %v307, %v294
    %v310 = vsub.f32 %v308, %v294
    %v311 = vand.u32 2147483647, %v309
    %v312 = vand.u32 2147483647, %v310
    %v313 = vsub.f32 %v311, 0.5
    %v314 = vsub.f32 %v312, 0.5
    %v315 = vmul.f32 %v313, %v298
    %v316 = vmul.f32 %v314, %v298
    %v317 = vand.u32 2147483647, %v315
    %v318 = vand.u32 2147483647, %v316
    %vm319 = vcmp.lt.f32.partialorder %v315, 0.0
    %vm320 = vcmp.lt.f32.partialorder %v316, 0.0
    %v321 = vmin.f32 %v317, 80.0
    %v322 = vmin.f32 %v318, 80.0
    %v323 = vsel %vm319, %v321, %v317
    %v324 = vsel %vm320, %v322, %v318
    %v325 = vsub.f32 0.0, %v323
    %v326 = vsub.f32 0.0, %v324
    %v327 = vmul.f32 %v325, 1.442695
    %v328 = vpow.pop %v327
    %v329 = vmul.f32 %v326, 1.442695
    %v330 = vpow.pop %v329
    %v331 = vadd.f32 %v328, %v302
    %v332 = vadd.f32 %v330, %v302
    %v333 = vmul.f32 %v328, %v302
    %v334 = vmul.f32 %v330, %v302
    %v335 = vadd.f32 %v333, 1.0
    %v336 = vadd.f32 %v334, 1.0
    %v337 = vsel %vm319, %v331, %v335
    %v338 = vsel %vm320, %v332, %v336
    %v339 = vadd.f32 %v323, %v306
    %v340 = vadd.f32 %v324, %v306
    %v341 = vadd.f32 %v328, 1.0
    %v342 = vadd.f32 %v330, 1.0
    %v343 = vmul.f32 %v341, %v337
    %v344 = vmul.f32 %v342, %v338
    %v345 = vlog2.pop %v343
    %v346 = vmul.f32 %v345, 0.6931472
    %v347 = vlog2.pop %v344
    %v348 = vmul.f32 %v347, 0.6931472
    %v349 = vadd.f32 %v339, %v346
    %v350 = vadd.f32 %v340, %v348
    %v351 = vadd.f32 %v349, %v350
    %352 = vadd.xlane.f32.xlu0 %v351
    %v353 = vpop.xlane.xlu0 %352
    %v354 = vrot.slane %v353, 4
    %v355 = vadd.f32 %v353, %v354
    %v356 = vrot.slane %v355, 2
    %v357 = vadd.f32 %v355, %v356
    %v358 = vrot.slane %v357, 1
    %v359 = vadd.f32 %v357, %v358
    %s360 = vtos %v359
    %s361 = smul.f32 %s360, 1.442695
    %s362 = scalar_lea.smem [#allocation2], 0
    %363 = sst [smem:[%s362]] %s361
    // Predicated region
    $region34: #{_forward_impl.7} parent=1 // pred_check
      _
    $region35: #{_forward_impl.7} parent=1 // pred_check_branch
      %365 = sbr.rel (0) target = $region37
    $region36: #{_forward_impl.7} parent=1 // pred_region
      %s367 = ssub.s32 16, 16
      %368 = vsyncadd [#allocation3], %s367
      %371 = dma.smem_to_hbm [#allocation2], 16, %s8, [#allocation3]
    $region37: #{_forward_impl.7} parent=1 // pred_fallthru
      _
    // Predicated region
    $region38: #{_forward_impl.7} parent=1 // pred_check
      _
    $region39: #{_forward_impl.7} parent=1 // pred_check_branch
      %373 = sbr.rel (0) target = $region41
    $region40: #{_forward_impl.7} parent=1 // pred_region
      %374 = dma.done [#allocation3], 16
    $region41: #{_forward_impl.7} parent=1 // pred_fallthru
      _
    %375 = sfence
    %376 = vsyncpa [#allocation3], 1

</llo_original>
